<compile_context>
chip_gen: v7x
topology: tpu7x:2x2x1
jax: 0.10.0
libtpu: 0.0.40
codegen_flags: <defaults>
</compile_context>

<pallas_src>
import jax
import jax.numpy as jnp
import numpy as np
from jax import lax
from jax.experimental import pallas as pl
from jax.experimental.pallas import tpu as pltpu

LANE = 128   # TPU lane width: keep all GEMM channel dims multiples of this.
SUB = 8      # sublane width: keep scratch row offsets aligned to this.


def _round_up(x, m):
    return ((x + m - 1) // m) * m


def _pad_axis(a, axis, target):
    pad = target - a.shape[axis]
    if pad == 0:
        return a
    widths = [(0, 0)] * a.ndim
    widths[axis] = (0, pad)
    return jnp.pad(a, widths)


# ---------------------------------------------------------------------------
# Fused Pallas kernel: one batch image per grid step
# ---------------------------------------------------------------------------
def _make_kernel(Ho, Wo, T):
    """Builds the kernel for a fixed output spatial size (Ho, Wo).

    T = number of zero halo rows above/below the flattened h1 image inside the
    scratch buffer (multiple of 8, >= Wo+1) so every scratch store is aligned.
    """
    M = Ho * Wo

    def kernel(x_ref, w1_ref, b1_ref, w2_ref, b2_ref, w3_ref, b3_ref,
               ws_ref, bs_ref, ml_ref, mr_ref, o_ref, buf_ref):
        cp = x_ref.shape[-1]
        f1p = w1_ref.shape[1]
        f2p = w2_ref.shape[1]
        f3p = w3_ref.shape[1]

        # Input tile (stride already folded by the wrapper); reused for shortcut.
        x_flat = x_ref[...].reshape(M, cp)

        # ---- layer1: 1x1 conv + bias + ReLU --------------------------------
        h1 = jnp.dot(x_flat, w1_ref[...], preferred_element_type=jnp.float32)
        h1 = jnp.maximum(h1 + b1_ref[...], 0.0)

        # Stage h1 into the flat halo buffer: rows [0,T) and [T+M, T+M+T) are
        # zeros (the 3x3 conv's top/bottom zero padding); h1 lives at [T, T+M).
        # All three stores start at sublane-aligned offsets.
        buf_ref[0:T, :] = jnp.zeros((T, f1p), jnp.float32)
        buf_ref[T + M:T + M + T, :] = jnp.zeros((T, f1p), jnp.float32)
        buf_ref[T:T + M, :] = h1

        # Column-border masks (host-precomputed, VMEM-resident):
        #   mask_l zeroes output rows with j == 0      (used for dj = -1 taps)
        #   mask_r zeroes output rows with j == Wo - 1 (used for dj = +1 taps)
        mask_l = ml_ref[...]
        mask_r = mr_ref[...]

        # ---- layer2: 3x3 conv, stride 1, pad 1 == nine accumulating dots ----
        acc = jnp.zeros((M, f2p), jnp.float32)
        for di in (-1, 0, 1):
            for dj in (-1, 0, 1):
                start = T + di * Wo + dj            # static Python int
                tap = buf_ref[start:start + M, :]   # (M, f1p) row-shifted view
                if dj == -1:
                    tap = tap * mask_l
                elif dj == 1:
                    tap = tap * mask_r
                t = (di + 1) * 3 + (dj + 1)
                w_tap = w2_ref[t * f1p:(t + 1) * f1p, :]
                acc = acc + jnp.dot(tap, w_tap, preferred_element_type=jnp.float32)
        h2 = jnp.maximum(acc + b2_ref[...], 0.0)

        # ---- layer3 (1x1) + shortcut (1x1) + add + ReLU, fused epilogue -----
        y = jnp.dot(h2, w3_ref[...], preferred_element_type=jnp.float32) + b3_ref[...]
        y = y + jnp.dot(x_flat, ws_ref[...], preferred_element_type=jnp.float32) + bs_ref[...]
        o_ref[...] = jnp.maximum(y, 0.0).reshape(1, Ho, Wo, f3p).astype(o_ref.dtype)

    return kernel


# ---------------------------------------------------------------------------
# Parameter preparation (torch OIHW -> padded GEMM layouts), done once
# ---------------------------------------------------------------------------
def prepare_params(tparams):
    f1, cin = tparams["w1"].shape[:2]
    f2 = tparams["w2"].shape[0]
    f3 = tparams["w3"].shape[0]
    cp, f1p, f2p, f3p = (_round_up(c, LANE) for c in (cin, f1, f2, f3))

    # 1x1 convs: (Cout, Cin, 1, 1) -> (Cin, Cout), pad both axes
    w1 = _pad_axis(_pad_axis(jnp.transpose(tparams["w1"][:, :, 0, 0], (1, 0)), 0, cp), 1, f1p)
    b1 = _pad_axis(tparams["b1"].reshape(1, f1), 1, f1p)
    # 3x3 conv: (Cout, Cin, 3, 3) -> (kh, kw, Cin, Cout) -> (9, Cin, Cout) -> (9*f1p, f2p)
    w2 = jnp.transpose(tparams["w2"], (2, 3, 1, 0)).reshape(9, f1, f2)
    w2 = _pad_axis(_pad_axis(w2, 1, f1p), 2, f2p).reshape(9 * f1p, f2p)
    b2 = _pad_axis(tparams["b2"].reshape(1, f2), 1, f2p)
    w3 = _pad_axis(_pad_axis(jnp.transpose(tparams["w3"][:, :, 0, 0], (1, 0)), 0, f2p), 1, f3p)
    b3 = _pad_axis(tparams["b3"].reshape(1, f3), 1, f3p)
    ws = _pad_axis(_pad_axis(jnp.transpose(tparams["ws"][:, :, 0, 0], (1, 0)), 0, cp), 1, f3p)
    bs = _pad_axis(tparams["bs"].reshape(1, f3), 1, f3p)
    return dict(w1=w1, b1=b1, w2=w2, b2=b2, w3=w3, b3=b3, ws=ws, bs=bs, f3=f3)


# ---------------------------------------------------------------------------
# conv_block forward
# ---------------------------------------------------------------------------
def conv_block_forward(x_nchw, params, stride):
    """Replicates conv_block.forward (no batch norm, shortcut=True, activation=True)."""
    N = x_nchw.shape[0]
    cp, f1p = params["w1"].shape
    f2p, f3p = params["w3"].shape
    f3 = params["f3"]

    x = jnp.transpose(x_nchw, (0, 2, 3, 1))          # NHWC
    xs = x[:, ::stride, ::stride, :]                 # 1x1 stride-s sampling (pad=0)
    Ho, Wo = xs.shape[1], xs.shape[2]
    xs = _pad_axis(xs, 3, cp).astype(jnp.float32)    # lane-dense channel axis
    M = Ho * Wo
    T = _round_up(Wo + 1, SUB)                       # halo rows (aligned, >= Wo+1)
    rows = T + M + T

    # Left/right image-border masks for the shifted 3x3 taps (host-side, tiny).
    j = np.arange(M) % Wo
    mask_l = jnp.asarray((j != 0).astype(np.float32).reshape(M, 1))
    mask_r = jnp.asarray((j != Wo - 1).astype(np.float32).reshape(M, 1))

    kernel = _make_kernel(Ho, Wo, T)

    # Advisory cost estimate + conservative explicit VMEM budget.
    flops = 2 * N * M * (cp * f1p + 9 * f1p * f2p + f2p * f3p + cp * f3p)
    w_keys = ("w1", "b1", "w2", "b2", "w3", "b3", "ws", "bs")
    w_bytes = sum(int(params[k].size) * 4 for k in w_keys)
    io_bytes = (N * M * cp + N * M * f3p) * 4 + w_bytes
    x_tile_b = M * cp * 4
    out_tile_b = M * f3p * 4
    scratch_b = rows * f1p * 4
    vmem_limit = int(min(2 * (x_tile_b + out_tile_b + w_bytes) + scratch_b + (8 << 20),
                         32 << 20))

    grid_spec = pltpu.PrefetchScalarGridSpec(
        num_scalar_prefetch=0,
        grid=(N,),  # one image per step; "parallel" -> sharded across megacore TCs
        in_specs=[
            pl.BlockSpec((1, Ho, Wo, cp), lambda n: (n, 0, 0, 0)),
            # Weights / biases / masks: same block every step -> VMEM-resident.
            pl.BlockSpec((cp, f1p), lambda n: (0, 0)),
            pl.BlockSpec((1, f1p), lambda n: (0, 0)),
            pl.BlockSpec((9 * f1p, f2p), lambda n: (0, 0)),
            pl.BlockSpec((1, f2p), lambda n: (0, 0)),
            pl.BlockSpec((f2p, f3p), lambda n: (0, 0)),
            pl.BlockSpec((1, f3p), lambda n: (0, 0)),
            pl.BlockSpec((cp, f3p), lambda n: (0, 0)),
            pl.BlockSpec((1, f3p), lambda n: (0, 0)),
            pl.BlockSpec((M, 1), lambda n: (0, 0)),
            pl.BlockSpec((M, 1), lambda n: (0, 0)),
        ],
        out_specs=pl.BlockSpec((1, Ho, Wo, f3p), lambda n: (n, 0, 0, 0)),
        scratch_shapes=[pltpu.VMEM((rows, f1p), jnp.float32)],
    )

    out = pl.pallas_call(
        kernel,
        out_shape=jax.ShapeDtypeStruct((N, Ho, Wo, f3p), jnp.float32),
        grid_spec=grid_spec,
        compiler_params=pltpu.CompilerParams(
            dimension_semantics=("parallel",),
            vmem_limit_bytes=vmem_limit,
        ),
        cost_estimate=pl.CostEstimate(flops=flops, transcendentals=0,
                                      bytes_accessed=io_bytes),
    )(xs, params["w1"], params["b1"], params["w2"], params["b2"],
      params["w3"], params["b3"], params["ws"], params["bs"], mask_l, mask_r)

    out = out[..., :f3]                              # drop channel padding
    return jnp.transpose(out, (0, 3, 1, 2))          # back to NCHW


# ---------------------------------------------------------------------------
# Pure-JAX reference (PyTorch conv semantics via lax.conv) for verification
# ---------------------------------------------------------------------------
def _ref_forward(x_nchw, tparams, stride):
    def conv(x, w, b, s, pad):
        y = lax.conv_general_dilated(
            x, w, window_strides=(s, s), padding=[(pad, pad), (pad, pad)],
            dimension_numbers=("NCHW", "OIHW", "NCHW"))
        return y + b[None, :, None, None]

    h = jnp.maximum(conv(x_nchw, tparams["w1"], tparams["b1"], stride, 0), 0.0)
    h = jnp.maximum(conv(h, tparams["w2"], tparams["b2"], 1, 1), 0.0)
    h = conv(h, tparams["w3"], tparams["b3"], 1, 0)
    sc = conv(x_nchw, tparams["ws"], tparams["bs"], stride, 0)
    return jnp.maximum(h + sc, 0.0)


if __name__ == "__main__":
    # Small, conv_block-consistent shapes
    N, Cin, H, W = 2, 4, 16, 16
    filters = (4, 4, 8)
    stride = 2
    f1, f2, f3 = filters

    key = jax.random.PRNGKey(0)
    ks = jax.random.split(key, 9)
    x = jax.random.normal(ks[0], (N, Cin, H, W), dtype=jnp.float32)

    # Deterministic parameter init (torch OIHW conv weight shapes)
    tparams = {
        "w1": 0.1 * jax.random.normal(ks[1], (f1, Cin, 1, 1), dtype=jnp.float32),
        "b1": 0.1 * jax.random.normal(ks[2], (f1,), dtype=jnp.float32),
        "w2": 0.1 * jax.random.normal(ks[3], (f2, f1, 3, 3), dtype=jnp.float32),
        "b2": 0.1 * jax.random.normal(ks[4], (f2,), dtype=jnp.float32),
        "w3": 0.1 * jax.random.normal(ks[5], (f3, f2, 1, 1), dtype=jnp.float32),
        "b3": 0.1 * jax.random.normal(ks[6], (f3,), dtype=jnp.float32),
        "ws": 0.1 * jax.random.normal(ks[7], (f3, Cin, 1, 1), dtype=jnp.float32),
        "bs": 0.1 * jax.random.normal(ks[8], (f3,), dtype=jnp.float32),
    }

    params = prepare_params(tparams)

    out = conv_block_forward(x, params, stride)
    out = jax.block_until_ready(out)

    ref = jax.block_until_ready(_ref_forward(x, tparams, stride))
    np.testing.assert_allclose(np.asarray(out), np.asarray(ref), rtol=1e-4, atol=1e-4)

    print("KERNEL_OK")
</pallas_src>

<mosaic_0001>
module attributes {stable_mosaic.version = 11 : i64} {
  func.func @kernel(%arg0: i32, %arg1: memref<1x8x8x128xf32, #tpu.memory_space<vmem>>, %arg2: memref<128x128xf32, #tpu.memory_space<vmem>>, %arg3: memref<1x128xf32, #tpu.memory_space<vmem>>, %arg4: memref<1152x128xf32, #tpu.memory_space<vmem>>, %arg5: memref<1x128xf32, #tpu.memory_space<vmem>>, %arg6: memref<128x128xf32, #tpu.memory_space<vmem>>, %arg7: memref<1x128xf32, #tpu.memory_space<vmem>>, %arg8: memref<128x128xf32, #tpu.memory_space<vmem>>, %arg9: memref<1x128xf32, #tpu.memory_space<vmem>>, %arg10: memref<64x1xf32, #tpu.memory_space<vmem>>, %arg11: memref<64x1xf32, #tpu.memory_space<vmem>>, %arg12: memref<1x8x8x128xf32, #tpu.memory_space<vmem>>, %arg13: memref<96x128xf32, #tpu.memory_space<vmem>>) attributes {dimension_semantics = [#tpu.dimension_semantics<parallel>], iteration_bounds = array<i64: 2>, scalar_prefetch = 0 : i64, scratch_operands = 1 : i64, tpu.core_type = #tpu.core_type<tc>, window_params = [{transform_indices = @transform_0, window_bounds = array<i64: 1, 8, 8, 128>}, {pipeline_mode = #tpu.pipeline_mode<synchronous>, transform_indices = @transform_1, window_bounds = array<i64: 128, 128>}, {pipeline_mode = #tpu.pipeline_mode<synchronous>, transform_indices = @transform_2, window_bounds = array<i64: 1, 128>}, {pipeline_mode = #tpu.pipeline_mode<synchronous>, transform_indices = @transform_3, window_bounds = array<i64: 1152, 128>}, {pipeline_mode = #tpu.pipeline_mode<synchronous>, transform_indices = @transform_4, window_bounds = array<i64: 1, 128>}, {pipeline_mode = #tpu.pipeline_mode<synchronous>, transform_indices = @transform_5, window_bounds = array<i64: 128, 128>}, {pipeline_mode = #tpu.pipeline_mode<synchronous>, transform_indices = @transform_6, window_bounds = array<i64: 1, 128>}, {pipeline_mode = #tpu.pipeline_mode<synchronous>, transform_indices = @transform_7, window_bounds = array<i64: 128, 128>}, {pipeline_mode = #tpu.pipeline_mode<synchronous>, transform_indices = @transform_8, window_bounds = array<i64: 1, 128>}, {pipeline_mode = #tpu.pipeline_mode<synchronous>, transform_indices = @transform_9, window_bounds = array<i64: 64, 1>}, {pipeline_mode = #tpu.pipeline_mode<synchronous>, transform_indices = @transform_10, window_bounds = array<i64: 64, 1>}, {transform_indices = @transform_11, window_bounds = array<i64: 1, 8, 8, 128>}]} {
    %c0 = arith.constant 0 : index
    %c0_0 = arith.constant 0 : index
    %c0_1 = arith.constant 0 : index
    %c0_2 = arith.constant 0 : index
    %0 = vector.load %arg1[%c0, %c0_0, %c0_1, %c0_2] : memref<1x8x8x128xf32, #tpu.memory_space<vmem>>, vector<1x8x8x128xf32>
    %1 = vector.shape_cast %0 : vector<1x8x8x128xf32> to vector<64x128xf32>
    %c0_3 = arith.constant 0 : index
    %c0_4 = arith.constant 0 : index
    %2 = vector.load %arg2[%c0_3, %c0_4] : memref<128x128xf32, #tpu.memory_space<vmem>>, vector<128x128xf32>
    %cst = arith.constant dense<0.000000e+00> : vector<64x128xf32>
    %3 = tpu.matmul %1, %2, %cst {dimension_numbers = #tpu.dot_dimension_numbers<[1], [0], [0], [1], [0, 0, 1, 1], [], []>} : vector<64x128xf32>, vector<128x128xf32>, vector<64x128xf32> -> vector<64x128xf32>
    %c0_5 = arith.constant 0 : index
    %c0_6 = arith.constant 0 : index
    %4 = vector.load %arg3[%c0_5, %c0_6] : memref<1x128xf32, #tpu.memory_space<vmem>>, vector<1x128xf32>
    %5 = vector.broadcast %4 : vector<1x128xf32> to vector<64x128xf32>
    %6 = arith.addf %3, %5 : vector<64x128xf32>
    %cst_7 = arith.constant 0.000000e+00 : f32
    %7 = vector.broadcast %cst_7 : f32 to vector<64x128xf32>
    %8 = arith.maximumf %6, %7 : vector<64x128xf32>
    %cst_8 = arith.constant 0.000000e+00 : f32
    %9 = vector.broadcast %cst_8 : f32 to vector<16x128xf32>
    %c0_9 = arith.constant 0 : index
    %c0_10 = arith.constant 0 : index
    %10 = vector.load %arg13[%c0_9, %c0_10] : memref<96x128xf32, #tpu.memory_space<vmem>>, vector<16x128xf32>
    tpu.vector_store %arg13[%c0_9, %c0_10], %9 {strides = array<i32>} : memref<96x128xf32, #tpu.memory_space<vmem>>, vector<16x128xf32>,
    %cst_11 = arith.constant 0.000000e+00 : f32
    %11 = vector.broadcast %cst_11 : f32 to vector<16x128xf32>
    %c80 = arith.constant 80 : index
    %c0_12 = arith.constant 0 : index
    %12 = vector.load %arg13[%c80, %c0_12] : memref<96x128xf32, #tpu.memory_space<vmem>>, vector<16x128xf32>
    tpu.vector_store %arg13[%c80, %c0_12], %11 {strides = array<i32>} : memref<96x128xf32, #tpu.memory_space<vmem>>, vector<16x128xf32>,
    %c16 = arith.constant 16 : index
    %c0_13 = arith.constant 0 : index
    %13 = vector.load %arg13[%c16, %c0_13] : memref<96x128xf32, #tpu.memory_space<vmem>>, vector<64x128xf32>
    tpu.vector_store %arg13[%c16, %c0_13], %8 {strides = array<i32>} : memref<96x128xf32, #tpu.memory_space<vmem>>, vector<64x128xf32>,
    %c0_14 = arith.constant 0 : index
    %c0_15 = arith.constant 0 : index
    %14 = vector.load %arg10[%c0_14, %c0_15] : memref<64x1xf32, #tpu.memory_space<vmem>>, vector<64x1xf32>
    %c0_16 = arith.constant 0 : index
    %c0_17 = arith.constant 0 : index
    %15 = vector.load %arg11[%c0_16, %c0_17] : memref<64x1xf32, #tpu.memory_space<vmem>>, vector<64x1xf32>
    %cst_18 = arith.constant 0.000000e+00 : f32
    %16 = vector.broadcast %cst_18 : f32 to vector<64x128xf32>
    %c7 = arith.constant 7 : index
    %c0_19 = arith.constant 0 : index
    %17 = vector.load %arg13[%c7, %c0_19] : memref<96x128xf32, #tpu.memory_space<vmem>>, vector<64x128xf32>
    %18 = vector.broadcast %14 : vector<64x1xf32> to vector<64x128xf32>
    %19 = arith.mulf %17, %18 : vector<64x128xf32>
    %c0_20 = arith.constant 0 : index
    %c0_21 = arith.constant 0 : index
    %20 = vector.load %arg4[%c0_20, %c0_21] : memref<1152x128xf32, #tpu.memory_space<vmem>>, vector<128x128xf32>
    %cst_22 = arith.constant dense<0.000000e+00> : vector<64x128xf32>
    %21 = tpu.matmul %19, %20, %cst_22 {dimension_numbers = #tpu.dot_dimension_numbers<[1], [0], [0], [1], [0, 0, 1, 1], [], []>} : vector<64x128xf32>, vector<128x128xf32>, vector<64x128xf32> -> vector<64x128xf32>
    %22 = arith.addf %16, %21 : vector<64x128xf32>
    %c8 = arith.constant 8 : index
    %c0_23 = arith.constant 0 : index
    %23 = vector.load %arg13[%c8, %c0_23] : memref<96x128xf32, #tpu.memory_space<vmem>>, vector<64x128xf32>
    %c128 = arith.constant 128 : index
    %c0_24 = arith.constant 0 : index
    %24 = vector.load %arg4[%c128, %c0_24] : memref<1152x128xf32, #tpu.memory_space<vmem>>, vector<128x128xf32>
    %cst_25 = arith.constant dense<0.000000e+00> : vector<64x128xf32>
    %25 = tpu.matmul %23, %24, %cst_25 {dimension_numbers = #tpu.dot_dimension_numbers<[1], [0], [0], [1], [0, 0, 1, 1], [], []>} : vector<64x128xf32>, vector<128x128xf32>, vector<64x128xf32> -> vector<64x128xf32>
    %26 = arith.addf %22, %25 : vector<64x128xf32>
    %c9 = arith.constant 9 : index
    %c0_26 = arith.constant 0 : index
    %27 = vector.load %arg13[%c9, %c0_26] : memref<96x128xf32, #tpu.memory_space<vmem>>, vector<64x128xf32>
    %28 = vector.broadcast %15 : vector<64x1xf32> to vector<64x128xf32>
    %29 = arith.mulf %27, %28 : vector<64x128xf32>
    %c256 = arith.constant 256 : index
    %c0_27 = arith.constant 0 : index
    %30 = vector.load %arg4[%c256, %c0_27] : memref<1152x128xf32, #tpu.memory_space<vmem>>, vector<128x128xf32>
    %cst_28 = arith.constant dense<0.000000e+00> : vector<64x128xf32>
    %31 = tpu.matmul %29, %30, %cst_28 {dimension_numbers = #tpu.dot_dimension_numbers<[1], [0], [0], [1], [0, 0, 1, 1], [], []>} : vector<64x128xf32>, vector<128x128xf32>, vector<64x128xf32> -> vector<64x128xf32>
    %32 = arith.addf %26, %31 : vector<64x128xf32>
    %c15 = arith.constant 15 : index
    %c0_29 = arith.constant 0 : index
    %33 = vector.load %arg13[%c15, %c0_29] : memref<96x128xf32, #tpu.memory_space<vmem>>, vector<64x128xf32>
    %34 = vector.broadcast %14 : vector<64x1xf32> to vector<64x128xf32>
    %35 = arith.mulf %33, %34 : vector<64x128xf32>
    %c384 = arith.constant 384 : index
    %c0_30 = arith.constant 0 : index
    %36 = vector.load %arg4[%c384, %c0_30] : memref<1152x128xf32, #tpu.memory_space<vmem>>, vector<128x128xf32>
    %cst_31 = arith.constant dense<0.000000e+00> : vector<64x128xf32>
    %37 = tpu.matmul %35, %36, %cst_31 {dimension_numbers = #tpu.dot_dimension_numbers<[1], [0], [0], [1], [0, 0, 1, 1], [], []>} : vector<64x128xf32>, vector<128x128xf32>, vector<64x128xf32> -> vector<64x128xf32>
    %38 = arith.addf %32, %37 : vector<64x128xf32>
    %c16_32 = arith.constant 16 : index
    %c0_33 = arith.constant 0 : index
    %39 = vector.load %arg13[%c16_32, %c0_33] : memref<96x128xf32, #tpu.memory_space<vmem>>, vector<64x128xf32>
    %c512 = arith.constant 512 : index
    %c0_34 = arith.constant 0 : index
    %40 = vector.load %arg4[%c512, %c0_34] : memref<1152x128xf32, #tpu.memory_space<vmem>>, vector<128x128xf32>
    %cst_35 = arith.constant dense<0.000000e+00> : vector<64x128xf32>
    %41 = tpu.matmul %39, %40, %cst_35 {dimension_numbers = #tpu.dot_dimension_numbers<[1], [0], [0], [1], [0, 0, 1, 1], [], []>} : vector<64x128xf32>, vector<128x128xf32>, vector<64x128xf32> -> vector<64x128xf32>
    %42 = arith.addf %38, %41 : vector<64x128xf32>
    %c17 = arith.constant 17 : index
    %c0_36 = arith.constant 0 : index
    %43 = vector.load %arg13[%c17, %c0_36] : memref<96x128xf32, #tpu.memory_space<vmem>>, vector<64x128xf32>
    %44 = vector.broadcast %15 : vector<64x1xf32> to vector<64x128xf32>
    %45 = arith.mulf %43, %44 : vector<64x128xf32>
    %c640 = arith.constant 640 : index
    %c0_37 = arith.constant 0 : index
    %46 = vector.load %arg4[%c640, %c0_37] : memref<1152x128xf32, #tpu.memory_space<vmem>>, vector<128x128xf32>
    %cst_38 = arith.constant dense<0.000000e+00> : vector<64x128xf32>
    %47 = tpu.matmul %45, %46, %cst_38 {dimension_numbers = #tpu.dot_dimension_numbers<[1], [0], [0], [1], [0, 0, 1, 1], [], []>} : vector<64x128xf32>, vector<128x128xf32>, vector<64x128xf32> -> vector<64x128xf32>
    %48 = arith.addf %42, %47 : vector<64x128xf32>
    %c23 = arith.constant 23 : index
    %c0_39 = arith.constant 0 : index
    %49 = vector.load %arg13[%c23, %c0_39] : memref<96x128xf32, #tpu.memory_space<vmem>>, vector<64x128xf32>
    %50 = vector.broadcast %14 : vector<64x1xf32> to vector<64x128xf32>
    %51 = arith.mulf %49, %50 : vector<64x128xf32>
    %c768 = arith.constant 768 : index
    %c0_40 = arith.constant 0 : index
    %52 = vector.load %arg4[%c768, %c0_40] : memref<1152x128xf32, #tpu.memory_space<vmem>>, vector<128x128xf32>
    %cst_41 = arith.constant dense<0.000000e+00> : vector<64x128xf32>
    %53 = tpu.matmul %51, %52, %cst_41 {dimension_numbers = #tpu.dot_dimension_numbers<[1], [0], [0], [1], [0, 0, 1, 1], [], []>} : vector<64x128xf32>, vector<128x128xf32>, vector<64x128xf32> -> vector<64x128xf32>
    %54 = arith.addf %48, %53 : vector<64x128xf32>
    %c24 = arith.constant 24 : index
    %c0_42 = arith.constant 0 : index
    %55 = vector.load %arg13[%c24, %c0_42] : memref<96x128xf32, #tpu.memory_space<vmem>>, vector<64x128xf32>
    %c896 = arith.constant 896 : index
    %c0_43 = arith.constant 0 : index
    %56 = vector.load %arg4[%c896, %c0_43] : memref<1152x128xf32, #tpu.memory_space<vmem>>, vector<128x128xf32>
    %cst_44 = arith.constant dense<0.000000e+00> : vector<64x128xf32>
    %57 = tpu.matmul %55, %56, %cst_44 {dimension_numbers = #tpu.dot_dimension_numbers<[1], [0], [0], [1], [0, 0, 1, 1], [], []>} : vector<64x128xf32>, vector<128x128xf32>, vector<64x128xf32> -> vector<64x128xf32>
    %58 = arith.addf %54, %57 : vector<64x128xf32>
    %c25 = arith.constant 25 : index
    %c0_45 = arith.constant 0 : index
    %59 = vector.load %arg13[%c25, %c0_45] : memref<96x128xf32, #tpu.memory_space<vmem>>, vector<64x128xf32>
    %60 = vector.broadcast %15 : vector<64x1xf32> to vector<64x128xf32>
    %61 = arith.mulf %59, %60 : vector<64x128xf32>
    %c1024 = arith.constant 1024 : index
    %c0_46 = arith.constant 0 : index
    %62 = vector.load %arg4[%c1024, %c0_46] : memref<1152x128xf32, #tpu.memory_space<vmem>>, vector<128x128xf32>
    %cst_47 = arith.constant dense<0.000000e+00> : vector<64x128xf32>
    %63 = tpu.matmul %61, %62, %cst_47 {dimension_numbers = #tpu.dot_dimension_numbers<[1], [0], [0], [1], [0, 0, 1, 1], [], []>} : vector<64x128xf32>, vector<128x128xf32>, vector<64x128xf32> -> vector<64x128xf32>
    %64 = arith.addf %58, %63 : vector<64x128xf32>
    %c0_48 = arith.constant 0 : index
    %c0_49 = arith.constant 0 : index
    %65 = vector.load %arg5[%c0_48, %c0_49] : memref<1x128xf32, #tpu.memory_space<vmem>>, vector<1x128xf32>
    %66 = vector.broadcast %65 : vector<1x128xf32> to vector<64x128xf32>
    %67 = arith.addf %64, %66 : vector<64x128xf32>
    %cst_50 = arith.constant 0.000000e+00 : f32
    %68 = vector.broadcast %cst_50 : f32 to vector<64x128xf32>
    %69 = arith.maximumf %67, %68 : vector<64x128xf32>
    %c0_51 = arith.constant 0 : index
    %c0_52 = arith.constant 0 : index
    %70 = vector.load %arg6[%c0_51, %c0_52] : memref<128x128xf32, #tpu.memory_space<vmem>>, vector<128x128xf32>
    %cst_53 = arith.constant dense<0.000000e+00> : vector<64x128xf32>
    %71 = tpu.matmul %69, %70, %cst_53 {dimension_numbers = #tpu.dot_dimension_numbers<[1], [0], [0], [1], [0, 0, 1, 1], [], []>} : vector<64x128xf32>, vector<128x128xf32>, vector<64x128xf32> -> vector<64x128xf32>
    %c0_54 = arith.constant 0 : index
    %c0_55 = arith.constant 0 : index
    %72 = vector.load %arg7[%c0_54, %c0_55] : memref<1x128xf32, #tpu.memory_space<vmem>>, vector<1x128xf32>
    %73 = vector.broadcast %72 : vector<1x128xf32> to vector<64x128xf32>
    %74 = arith.addf %71, %73 : vector<64x128xf32>
    %c0_56 = arith.constant 0 : index
    %c0_57 = arith.constant 0 : index
    %75 = vector.load %arg8[%c0_56, %c0_57] : memref<128x128xf32, #tpu.memory_space<vmem>>, vector<128x128xf32>
    %cst_58 = arith.constant dense<0.000000e+00> : vector<64x128xf32>
    %76 = tpu.matmul %1, %75, %cst_58 {dimension_numbers = #tpu.dot_dimension_numbers<[1], [0], [0], [1], [0, 0, 1, 1], [], []>} : vector<64x128xf32>, vector<128x128xf32>, vector<64x128xf32> -> vector<64x128xf32>
    %77 = arith.addf %74, %76 : vector<64x128xf32>
    %c0_59 = arith.constant 0 : index
    %c0_60 = arith.constant 0 : index
    %78 = vector.load %arg9[%c0_59, %c0_60] : memref<1x128xf32, #tpu.memory_space<vmem>>, vector<1x128xf32>
    %79 = vector.broadcast %78 : vector<1x128xf32> to vector<64x128xf32>
    %80 = arith.addf %77, %79 : vector<64x128xf32>
    %cst_61 = arith.constant 0.000000e+00 : f32
    %81 = vector.broadcast %cst_61 : f32 to vector<64x128xf32>
    %82 = arith.maximumf %80, %81 : vector<64x128xf32>
    %83 = vector.shape_cast %82 : vector<64x128xf32> to vector<1x8x8x128xf32>
    %c0_62 = arith.constant 0 : index
    %c0_63 = arith.constant 0 : index
    %c0_64 = arith.constant 0 : index
    %c0_65 = arith.constant 0 : index
    %84 = vector.load %arg12[%c0_62, %c0_63, %c0_64, %c0_65] : memref<1x8x8x128xf32, #tpu.memory_space<vmem>>, vector<1x8x8x128xf32>
    tpu.vector_store %arg12[%c0_62, %c0_63, %c0_64, %c0_65], %83 {strides = array<i32>} : memref<1x8x8x128xf32, #tpu.memory_space<vmem>>, vector<1x8x8x128xf32>,
    return
  }
  func.func @transform_0(%arg0: i32) -> (i32, i32, i32, i32) {
    %c0_i32 = arith.constant 0 : i32
    %c0_i32_0 = arith.constant 0 : i32
    %c0_i32_1 = arith.constant 0 : i32
    %c0_i32_2 = arith.constant 0 : i32
    return %arg0, %c0_i32, %c0_i32_0, %c0_i32_1 : i32, i32, i32, i32
  }
  func.func @transform_1(%arg0: i32) -> (i32, i32) {
    %c0_i32 = arith.constant 0 : i32
    %c0_i32_0 = arith.constant 0 : i32
    %c0_i32_1 = arith.constant 0 : i32
    return %c0_i32, %c0_i32_0 : i32, i32
  }
  func.func @transform_2(%arg0: i32) -> (i32, i32) {
    %c0_i32 = arith.constant 0 : i32
    %c0_i32_0 = arith.constant 0 : i32
    %c0_i32_1 = arith.constant 0 : i32
    return %c0_i32, %c0_i32_0 : i32, i32
  }
  func.func @transform_3(%arg0: i32) -> (i32, i32) {
    %c0_i32 = arith.constant 0 : i32
    %c0_i32_0 = arith.constant 0 : i32
    %c0_i32_1 = arith.constant 0 : i32
    return %c0_i32, %c0_i32_0 : i32, i32
  }
  func.func @transform_4(%arg0: i32) -> (i32, i32) {
    %c0_i32 = arith.constant 0 : i32
    %c0_i32_0 = arith.constant 0 : i32
    %c0_i32_1 = arith.constant 0 : i32
    return %c0_i32, %c0_i32_0 : i32, i32
  }
  func.func @transform_5(%arg0: i32) -> (i32, i32) {
    %c0_i32 = arith.constant 0 : i32
    %c0_i32_0 = arith.constant 0 : i32
    %c0_i32_1 = arith.constant 0 : i32
    return %c0_i32, %c0_i32_0 : i32, i32
  }
  func.func @transform_6(%arg0: i32) -> (i32, i32) {
    %c0_i32 = arith.constant 0 : i32
    %c0_i32_0 = arith.constant 0 : i32
    %c0_i32_1 = arith.constant 0 : i32
    return %c0_i32, %c0_i32_0 : i32, i32
  }
  func.func @transform_7(%arg0: i32) -> (i32, i32) {
    %c0_i32 = arith.constant 0 : i32
    %c0_i32_0 = arith.constant 0 : i32
    %c0_i32_1 = arith.constant 0 : i32
    return %c0_i32, %c0_i32_0 : i32, i32
  }
  func.func @transform_8(%arg0: i32) -> (i32, i32) {
    %c0_i32 = arith.constant 0 : i32
    %c0_i32_0 = arith.constant 0 : i32
    %c0_i32_1 = arith.constant 0 : i32
    return %c0_i32, %c0_i32_0 : i32, i32
  }
  func.func @transform_9(%arg0: i32) -> (i32, i32) {
    %c0_i32 = arith.constant 0 : i32
    %c0_i32_0 = arith.constant 0 : i32
    %c0_i32_1 = arith.constant 0 : i32
    return %c0_i32, %c0_i32_0 : i32, i32
  }
  func.func @transform_10(%arg0: i32) -> (i32, i32) {
    %c0_i32 = arith.constant 0 : i32
    %c0_i32_0 = arith.constant 0 : i32
    %c0_i32_1 = arith.constant 0 : i32
    return %c0_i32, %c0_i32_0 : i32, i32
  }
  func.func @transform_11(%arg0: i32) -> (i32, i32, i32, i32) {
    %c0_i32 = arith.constant 0 : i32
    %c0_i32_0 = arith.constant 0 : i32
    %c0_i32_1 = arith.constant 0 : i32
    %c0_i32_2 = arith.constant 0 : i32
    return %arg0, %c0_i32, %c0_i32_0, %c0_i32_1 : i32, i32, i32, i32
  }
}

</mosaic_0001>

<llo_original>
// kernel: tpu_custom_call.1
$region0: #{tpu_custom_call.1}
  #allocation0 [shape = 'u32[]', space=smem, size = 0x4, offset = 0x4, fixed_abs, tag = 'smem constant byte address 0x4 - core index']
  #allocation1 [shape = 'u32[144,128]{1,0:T(1,128)}', space=vmem, size = 0x12000, scoped, tag = 'internal scratch']
  #allocation2 [shape = 'f32[96,128]{1,0:T(8,128)}', space=vmem, size = 0xc000, scoped, tag = 'scratch operand']
  %s0 = inlined_call_operand.vmem [shape: f32[2,8,8,128], index: 0, kind: input, shape index: {}]
  %s1 = inlined_call_operand.hbm [shape: f32[128,128], index: 1, kind: input, shape index: {}]
  %s2 = inlined_call_operand.vmem [shape: f32[1,128], index: 2, kind: input, shape index: {}]
  %s3 = inlined_call_operand.hbm [shape: f32[1152,128], index: 3, kind: input, shape index: {}]
  %s4 = inlined_call_operand.vmem [shape: f32[1,128], index: 4, kind: input, shape index: {}]
  %s5 = inlined_call_operand.hbm [shape: f32[128,128], index: 5, kind: input, shape index: {}]
  %s6 = inlined_call_operand.vmem [shape: f32[1,128], index: 6, kind: input, shape index: {}]
  %s7 = inlined_call_operand.hbm [shape: f32[128,128], index: 7, kind: input, shape index: {}]
  %s8 = inlined_call_operand.vmem [shape: f32[1,128], index: 8, kind: input, shape index: {}]
  %s9 = inlined_call_operand.vmem [shape: f32[64,1], index: 9, kind: input, shape index: {}]
  %s10 = inlined_call_operand.vmem [shape: f32[64,1], index: 10, kind: input, shape index: {}]
  %s11 = inlined_call_operand.hbm [shape: f32[2,8,8,128], index: 11, kind: output, shape index: {}]
  %s12 = sld [smem:[#allocation0]]
  $region93: #{tpu_custom_call.1} parent=0
    _
  %s14 = ssub.s32 1, %s12
  %s15 = scalar_select 0, %s14, %s12
  $region1: #{tpu_custom_call.1} parent=0
    #allocation3 [shape = 'u8[65536]{0}', space=vmem, size = 0x10000, scoped, tag = 'input window, operand 1, single buffered']
    #allocation4 [shape = 's32[2]{0}', space=sflag, size = 0x8, scoped, tag = 'scoped memory for tpu_custom_call.1']
    #allocation5 [shape = 's32[2]{0}', space=sflag, size = 0x8, scoped, tag = 'scoped memory for tpu_custom_call.1']
    #allocation6 [shape = 'u8[589824]{0}', space=vmem, size = 0x90000, scoped, tag = 'input window, operand 3, single buffered']
    #allocation7 [shape = 's32[1]{0}', space=sflag, size = 0x4, scoped, tag = 'scoped memory for tpu_custom_call.1']
    #allocation8 [shape = 'u8[65536]{0}', space=vmem, size = 0x10000, scoped, tag = 'input window, operand 5, single buffered']
    #allocation9 [shape = 'u8[65536]{0}', space=vmem, size = 0x10000, scoped, tag = 'input window, operand 7, single buffered']
    #allocation10 [shape = 's32[1]{0}', space=sflag, size = 0x4, scoped, tag = 'scoped memory for tpu_custom_call.1']
    #allocation11 [shape = 'u8[65536]{0}', space=vmem, size = 0x10000, scoped, tag = 'output window, operand 0']
    %16 = vsyncpa [#allocation4], 0
    %17 = vsyncpa [#allocation7], 0
    %18 = vsyncpa [#allocation10], 0
    %19 = vsyncpa [#allocation5], 0
    %s20 = scalar_lea.sflag [#allocation5], 1
    %21 = vsyncpa %s20, 0
    loop: start=0, step=1, limit=4
    $region2: #{tpu_custom_call.1} parent=1 // loop_pre_header
      _
    $region3: #{tpu_custom_call.1} parent=1 // loop_header
      %s23 = sphi 0, %s27
      %p24 = scmp.ge.s32.totalorder %s23, 4
      %s33 = sphi 0, %s35
      %s36 = sphi 0, %s33
      %s37 = sphi 0, %s36
      %s53 = sphi 0, %s37
      %s57 = sphi 0, %s57
      %s59 = sphi 0, %s57
      %s60 = sphi 0, %s59
      %s74 = sphi 0, %s60
      %s78 = sphi 0, %s78
      %s80 = sphi 0, %s78
      %s81 = sphi 0, %s80
      %s95 = sphi 0, %s81
      %s99 = sphi 0, %s99
      %s101 = sphi 0, %s99
      %s102 = sphi 0, %s101
      %s116 = sphi 0, %s102
      %s120 = sphi 0, %s120
      %s122 = sphi 0, %s120
      %s123 = sphi 0, %s122
      %s137 = sphi 0, %s123
      %s141 = sphi 0, %s141
      %s143 = sphi 0, %s141
      %s144 = sphi 0, %s143
      %s158 = sphi 0, %s144
      %s162 = sphi 0, %s162
      %s164 = sphi 0, %s162
      %s165 = sphi 0, %s164
      %s179 = sphi 0, %s165
      %s183 = sphi 0, %s183
      %s185 = sphi 0, %s183
      %s186 = sphi 0, %s185
      %s200 = sphi 0, %s186
      %s204 = sphi 0, %s204
      %s206 = sphi 0, %s204
      %s207 = sphi 0, %s206
      %s221 = sphi 0, %s207
      %s225 = sphi 0, %s225
      %s227 = sphi 0, %s225
      %s228 = sphi 0, %s227
      %s242 = sphi 0, %s228
      %s246 = sphi 0, %s246
      %s248 = sphi 0, %s246
      %s249 = sphi 0, %s248
      %s263 = sphi 0, %s249
      %s269 = sphi 0, %s271
      %s272 = sphi 0, %s269
      %s273 = sphi 0, %s272
      %s289 = sphi 0, %s273
    $region4: #{tpu_custom_call.1} parent=1 // loop_header_branch
      %26 = sbr.rel (%p24) target = $region8
    $region5: #{tpu_custom_call.1} parent=1 // loop_body
      %s28 = ssub.s32 %s23, 1
      %s29 = ssub.s32 %s23, 2
      %s30 = sadd.s32 %s23, 1
      %s31 = ssub.s32 %s23, %s30
      %p32 = scmp.eq.s32.totalorder %s31, 0
      %s34 = sadd.s32 %s33, 1
      %s35 = scalar_select %p32, %s33, %s34
      %p38 = pneg %p32
      %p39 = scmp.eq.s32.totalorder %s23, 1
      %p40 = por %p38, %p39
      %p41 = scmp.ne.s32.totalorder %s33, %s36
      %p42 = scmp.eq.s32.totalorder %s23, 0
      %p43 = por %p41, %p42
      %p44 = scmp.ne.s32.totalorder %s33, %s36
      %p45 = scmp.eq.s32.totalorder %s28, 1
      %p46 = por %p44, %p45
      %p47 = scmp.ne.s32.totalorder %s36, %s37
      %p48 = scmp.eq.s32.totalorder %s28, 0
      %p49 = por %p47, %p48
      %p50 = scmp.ne.s32.totalorder %s36, %s37
      %p51 = scmp.eq.s32.totalorder %s29, 1
      %p52 = por %p50, %p51
      %p54 = scmp.ne.s32.totalorder %s37, %s53
      %p55 = scmp.eq.s32.totalorder %s29, 0
      %p56 = por %p54, %p55
      %s58 = sadd.s32 %s57, 1
      %p61 = scmp.eq.s32.totalorder %s23, 1
      %p62 = scmp.ne.s32.totalorder %s57, %s59
      %p63 = scmp.eq.s32.totalorder %s23, 0
      %p64 = por %p62, %p63
      %p65 = scmp.ne.s32.totalorder %s57, %s59
      %p66 = scmp.eq.s32.totalorder %s28, 1
      %p67 = por %p65, %p66
      %p68 = scmp.ne.s32.totalorder %s59, %s60
      %p69 = scmp.eq.s32.totalorder %s28, 0
      %p70 = por %p68, %p69
      %p71 = scmp.ne.s32.totalorder %s59, %s60
      %p72 = scmp.eq.s32.totalorder %s29, 1
      %p73 = por %p71, %p72
      %p75 = scmp.ne.s32.totalorder %s60, %s74
      %p76 = scmp.eq.s32.totalorder %s29, 0
      %p77 = por %p75, %p76
      %s79 = sadd.s32 %s78, 1
      %p82 = scmp.eq.s32.totalorder %s23, 1
      %p83 = scmp.ne.s32.totalorder %s78, %s80
      %p84 = scmp.eq.s32.totalorder %s23, 0
      %p85 = por %p83, %p84
      %p86 = scmp.ne.s32.totalorder %s78, %s80
      %p87 = scmp.eq.s32.totalorder %s28, 1
      %p88 = por %p86, %p87
      %p89 = scmp.ne.s32.totalorder %s80, %s81
      %p90 = scmp.eq.s32.totalorder %s28, 0
      %p91 = por %p89, %p90
      %p92 = scmp.ne.s32.totalorder %s80, %s81
      %p93 = scmp.eq.s32.totalorder %s29, 1
      %p94 = por %p92, %p93
      %p96 = scmp.ne.s32.totalorder %s81, %s95
      %p97 = scmp.eq.s32.totalorder %s29, 0
      %p98 = por %p96, %p97
      %s100 = sadd.s32 %s99, 1
      %p103 = scmp.eq.s32.totalorder %s23, 1
      %p104 = scmp.ne.s32.totalorder %s99, %s101
      %p105 = scmp.eq.s32.totalorder %s23, 0
      %p106 = por %p104, %p105
      %p107 = scmp.ne.s32.totalorder %s99, %s101
      %p108 = scmp.eq.s32.totalorder %s28, 1
      %p109 = por %p107, %p108
      %p110 = scmp.ne.s32.totalorder %s101, %s102
      %p111 = scmp.eq.s32.totalorder %s28, 0
      %p112 = por %p110, %p111
      %p113 = scmp.ne.s32.totalorder %s101, %s102
      %p114 = scmp.eq.s32.totalorder %s29, 1
      %p115 = por %p113, %p114
      %p117 = scmp.ne.s32.totalorder %s102, %s116
      %p118 = scmp.eq.s32.totalorder %s29, 0
      %p119 = por %p117, %p118
      %s121 = sadd.s32 %s120, 1
      %p124 = scmp.eq.s32.totalorder %s23, 1
      %p125 = scmp.ne.s32.totalorder %s120, %s122
      %p126 = scmp.eq.s32.totalorder %s23, 0
      %p127 = por %p125, %p126
      %p128 = scmp.ne.s32.totalorder %s120, %s122
      %p129 = scmp.eq.s32.totalorder %s28, 1
      %p130 = por %p128, %p129
      %p131 = scmp.ne.s32.totalorder %s122, %s123
      %p132 = scmp.eq.s32.totalorder %s28, 0
      %p133 = por %p131, %p132
      %p134 = scmp.ne.s32.totalorder %s122, %s123
      %p135 = scmp.eq.s32.totalorder %s29, 1
      %p136 = por %p134, %p135
      %p138 = scmp.ne.s32.totalorder %s123, %s137
      %p139 = scmp.eq.s32.totalorder %s29, 0
      %p140 = por %p138, %p139
      %s142 = sadd.s32 %s141, 1
      %p145 = scmp.eq.s32.totalorder %s23, 1
      %p146 = scmp.ne.s32.totalorder %s141, %s143
      %p147 = scmp.eq.s32.totalorder %s23, 0
      %p148 = por %p146, %p147
      %p149 = scmp.ne.s32.totalorder %s141, %s143
      %p150 = scmp.eq.s32.totalorder %s28, 1
      %p151 = por %p149, %p150
      %p152 = scmp.ne.s32.totalorder %s143, %s144
      %p153 = scmp.eq.s32.totalorder %s28, 0
      %p154 = por %p152, %p153
      %p155 = scmp.ne.s32.totalorder %s143, %s144
      %p156 = scmp.eq.s32.totalorder %s29, 1
      %p157 = por %p155, %p156
      %p159 = scmp.ne.s32.totalorder %s144, %s158
      %p160 = scmp.eq.s32.totalorder %s29, 0
      %p161 = por %p159, %p160
      %s163 = sadd.s32 %s162, 1
      %p166 = scmp.eq.s32.totalorder %s23, 1
      %p167 = scmp.ne.s32.totalorder %s162, %s164
      %p168 = scmp.eq.s32.totalorder %s23, 0
      %p169 = por %p167, %p168
      %p170 = scmp.ne.s32.totalorder %s162, %s164
      %p171 = scmp.eq.s32.totalorder %s28, 1
      %p172 = por %p170, %p171
      %p173 = scmp.ne.s32.totalorder %s164, %s165
      %p174 = scmp.eq.s32.totalorder %s28, 0
      %p175 = por %p173, %p174
      %p176 = scmp.ne.s32.totalorder %s164, %s165
      %p177 = scmp.eq.s32.totalorder %s29, 1
      %p178 = por %p176, %p177
      %p180 = scmp.ne.s32.totalorder %s165, %s179
      %p181 = scmp.eq.s32.totalorder %s29, 0
      %p182 = por %p180, %p181
      %s184 = sadd.s32 %s183, 1
      %p187 = scmp.eq.s32.totalorder %s23, 1
      %p188 = scmp.ne.s32.totalorder %s183, %s185
      %p189 = scmp.eq.s32.totalorder %s23, 0
      %p190 = por %p188, %p189
      %p191 = scmp.ne.s32.totalorder %s183, %s185
      %p192 = scmp.eq.s32.totalorder %s28, 1
      %p193 = por %p191, %p192
      %p194 = scmp.ne.s32.totalorder %s185, %s186
      %p195 = scmp.eq.s32.totalorder %s28, 0
      %p196 = por %p194, %p195
      %p197 = scmp.ne.s32.totalorder %s185, %s186
      %p198 = scmp.eq.s32.totalorder %s29, 1
      %p199 = por %p197, %p198
      %p201 = scmp.ne.s32.totalorder %s186, %s200
      %p202 = scmp.eq.s32.totalorder %s29, 0
      %p203 = por %p201, %p202
      %s205 = sadd.s32 %s204, 1
      %p208 = scmp.eq.s32.totalorder %s23, 1
      %p209 = scmp.ne.s32.totalorder %s204, %s206
      %p210 = scmp.eq.s32.totalorder %s23, 0
      %p211 = por %p209, %p210
      %p212 = scmp.ne.s32.totalorder %s204, %s206
      %p213 = scmp.eq.s32.totalorder %s28, 1
      %p214 = por %p212, %p213
      %p215 = scmp.ne.s32.totalorder %s206, %s207
      %p216 = scmp.eq.s32.totalorder %s28, 0
      %p217 = por %p215, %p216
      %p218 = scmp.ne.s32.totalorder %s206, %s207
      %p219 = scmp.eq.s32.totalorder %s29, 1
      %p220 = por %p218, %p219
      %p222 = scmp.ne.s32.totalorder %s207, %s221
      %p223 = scmp.eq.s32.totalorder %s29, 0
      %p224 = por %p222, %p223
      %s226 = sadd.s32 %s225, 1
      %p229 = scmp.eq.s32.totalorder %s23, 1
      %p230 = scmp.ne.s32.totalorder %s225, %s227
      %p231 = scmp.eq.s32.totalorder %s23, 0
      %p232 = por %p230, %p231
      %p233 = scmp.ne.s32.totalorder %s225, %s227
      %p234 = scmp.eq.s32.totalorder %s28, 1
      %p235 = por %p233, %p234
      %p236 = scmp.ne.s32.totalorder %s227, %s228
      %p237 = scmp.eq.s32.totalorder %s28, 0
      %p238 = por %p236, %p237
      %p239 = scmp.ne.s32.totalorder %s227, %s228
      %p240 = scmp.eq.s32.totalorder %s29, 1
      %p241 = por %p239, %p240
      %p243 = scmp.ne.s32.totalorder %s228, %s242
      %p244 = scmp.eq.s32.totalorder %s29, 0
      %p245 = por %p243, %p244
      %s247 = sadd.s32 %s246, 1
      %p250 = scmp.eq.s32.totalorder %s23, 1
      %p251 = scmp.ne.s32.totalorder %s246, %s248
      %p252 = scmp.eq.s32.totalorder %s23, 0
      %p253 = por %p251, %p252
      %p254 = scmp.ne.s32.totalorder %s246, %s248
      %p255 = scmp.eq.s32.totalorder %s28, 1
      %p256 = por %p254, %p255
      %p257 = scmp.ne.s32.totalorder %s248, %s249
      %p258 = scmp.eq.s32.totalorder %s28, 0
      %p259 = por %p257, %p258
      %p260 = scmp.ne.s32.totalorder %s248, %s249
      %p261 = scmp.eq.s32.totalorder %s29, 1
      %p262 = por %p260, %p261
      %p264 = scmp.ne.s32.totalorder %s249, %s263
      %p265 = scmp.eq.s32.totalorder %s29, 0
      %p266 = por %p264, %p265
      %s267 = ssub.s32 %s23, %s30
      %p268 = scmp.eq.s32.totalorder %s267, 0
      %s270 = sadd.s32 %s269, 1
      %s271 = scalar_select %p268, %s269, %s270
      %p274 = pneg %p268
      %p275 = scmp.eq.s32.totalorder %s23, 1
      %p276 = por %p274, %p275
      %p277 = scmp.ne.s32.totalorder %s269, %s272
      %p278 = scmp.eq.s32.totalorder %s23, 0
      %p279 = por %p277, %p278
      %p280 = scmp.ne.s32.totalorder %s269, %s272
      %p281 = scmp.eq.s32.totalorder %s28, 1
      %p282 = por %p280, %p281
      %p283 = scmp.ne.s32.totalorder %s272, %s273
      %p284 = scmp.eq.s32.totalorder %s28, 0
      %p285 = por %p283, %p284
      %p286 = scmp.ne.s32.totalorder %s272, %s273
      %p287 = scmp.eq.s32.totalorder %s29, 1
      %p288 = por %p286, %p287
      %p290 = scmp.ne.s32.totalorder %s273, %s289
      %p291 = scmp.eq.s32.totalorder %s29, 0
      %p292 = por %p290, %p291
      %p293 = scmp.le.s32.totalorder 1, %s23
      %p294 = scmp.lt.s32.totalorder %s23, 3
      %p295 = pnand %p293, %p294
      %p296 = pneg %p295
      // Predicated region
      $region9: #{tpu_custom_call.1} parent=5 // pred_check
        _
      $region10: #{tpu_custom_call.1} parent=5 // pred_check_branch
        %298 = sbr.rel (%p295) target = $region12
      $region11: #{tpu_custom_call.1} parent=5 // pred_region
        %s299 = ssub.s32 %s23, 1
        // Predicated region
        $region13: #{tpu_custom_call.1} parent=11 // pred_check
          %p300 = pneg %p70
        $region14: #{tpu_custom_call.1} parent=11 // pred_check_branch
          %302 = sbr.rel (%p300) target = $region16
        $region15: #{tpu_custom_call.1} parent=11 // pred_region
          %s304 = ssub.s32 2048, 2048
          %305 = vsyncadd [#allocation4], %s304
          %s306 = sshll.u32 [#allocation3], 4
          %s307 = int_to_ptr.vmem [resolvable:$true] %s306
          %312 = dma.hbm_to_vmem [thread:$0]  %s1, 2048, %s307, [#allocation4], 128, 128, 8
        $region16: #{tpu_custom_call.1} parent=11 // pred_fallthru
          _
        // Predicated region
        $region17: #{tpu_custom_call.1} parent=11 // pred_check
          %p313 = pneg %p91
        $region18: #{tpu_custom_call.1} parent=11 // pred_check_branch
          %315 = sbr.rel (%p313) target = $region20
        $region19: #{tpu_custom_call.1} parent=11 // pred_region
          _
        $region20: #{tpu_custom_call.1} parent=11 // pred_fallthru
          _
        // Predicated region
        $region21: #{tpu_custom_call.1} parent=11 // pred_check
          %p316 = pneg %p112
        $region22: #{tpu_custom_call.1} parent=11 // pred_check_branch
          %318 = sbr.rel (%p316) target = $region24
        $region23: #{tpu_custom_call.1} parent=11 // pred_region
          %s320 = ssub.s32 18432, 18432
          %321 = vsyncadd [#allocation7], %s320
          %s322 = sshll.u32 [#allocation6], 4
          %s323 = int_to_ptr.vmem [resolvable:$true] %s322
          %328 = dma.hbm_to_vmem [thread:$0]  %s3, 18432, %s323, [#allocation7], 128, 128, 8
        $region24: #{tpu_custom_call.1} parent=11 // pred_fallthru
          _
        // Predicated region
        $region25: #{tpu_custom_call.1} parent=11 // pred_check
          %p329 = pneg %p133
        $region26: #{tpu_custom_call.1} parent=11 // pred_check_branch
          %331 = sbr.rel (%p329) target = $region28
        $region27: #{tpu_custom_call.1} parent=11 // pred_region
          _
        $region28: #{tpu_custom_call.1} parent=11 // pred_fallthru
          _
        // Predicated region
        $region29: #{tpu_custom_call.1} parent=11 // pred_check
          %p332 = pneg %p154
        $region30: #{tpu_custom_call.1} parent=11 // pred_check_branch
          %334 = sbr.rel (%p332) target = $region32
        $region31: #{tpu_custom_call.1} parent=11 // pred_region
          %s336 = ssub.s32 2048, 2048
          %337 = vsyncadd [#allocation7], %s336
          %s338 = sshll.u32 [#allocation8], 4
          %s339 = int_to_ptr.vmem [resolvable:$true] %s338
          %344 = dma.hbm_to_vmem [thread:$0]  %s5, 2048, %s339, [#allocation7], 128, 128, 8
        $region32: #{tpu_custom_call.1} parent=11 // pred_fallthru
          _
        // Predicated region
        $region33: #{tpu_custom_call.1} parent=11 // pred_check
          %p345 = pneg %p175
        $region34: #{tpu_custom_call.1} parent=11 // pred_check_branch
          %347 = sbr.rel (%p345) target = $region36
        $region35: #{tpu_custom_call.1} parent=11 // pred_region
          _
        $region36: #{tpu_custom_call.1} parent=11 // pred_fallthru
          _
        // Predicated region
        $region37: #{tpu_custom_call.1} parent=11 // pred_check
          %p348 = pneg %p196
        $region38: #{tpu_custom_call.1} parent=11 // pred_check_branch
          %350 = sbr.rel (%p348) target = $region40
        $region39: #{tpu_custom_call.1} parent=11 // pred_region
          %s352 = ssub.s32 2048, 2048
          %353 = vsyncadd [#allocation10], %s352
          %s354 = sshll.u32 [#allocation9], 4
          %s355 = int_to_ptr.vmem [resolvable:$true] %s354
          %360 = dma.hbm_to_vmem [thread:$0]  %s7, 2048, %s355, [#allocation10], 128, 128, 8
        $region40: #{tpu_custom_call.1} parent=11 // pred_fallthru
          _
        // Predicated region
        $region41: #{tpu_custom_call.1} parent=11 // pred_check
          %p361 = pneg %p217
        $region42: #{tpu_custom_call.1} parent=11 // pred_check_branch
          %363 = sbr.rel (%p361) target = $region44
        $region43: #{tpu_custom_call.1} parent=11 // pred_region
          _
        $region44: #{tpu_custom_call.1} parent=11 // pred_fallthru
          _
        // Predicated region
        $region45: #{tpu_custom_call.1} parent=11 // pred_check
          %p364 = pneg %p238
        $region46: #{tpu_custom_call.1} parent=11 // pred_check_branch
          %366 = sbr.rel (%p364) target = $region48
        $region47: #{tpu_custom_call.1} parent=11 // pred_region
          _
        $region48: #{tpu_custom_call.1} parent=11 // pred_fallthru
          _
        // Predicated region
        $region49: #{tpu_custom_call.1} parent=11 // pred_check
          %p367 = pneg %p259
        $region50: #{tpu_custom_call.1} parent=11 // pred_check_branch
          %369 = sbr.rel (%p367) target = $region52
        $region51: #{tpu_custom_call.1} parent=11 // pred_region
          _
        $region52: #{tpu_custom_call.1} parent=11 // pred_fallthru
          _
      $region12: #{tpu_custom_call.1} parent=5 // pred_fallthru
        _
      %p370 = scmp.lt.s32.totalorder %s23, 2
      // Predicated region
      $region53: #{tpu_custom_call.1} parent=5 // pred_check
        %p371 = pneg %p370
      $region54: #{tpu_custom_call.1} parent=5 // pred_check_branch
        %373 = sbr.rel (%p371) target = $region56
      $region55: #{tpu_custom_call.1} parent=5 // pred_region
        // Predicated region
        $region57: #{tpu_custom_call.1} parent=55 // pred_check
          %p374 = pneg %p43
        $region58: #{tpu_custom_call.1} parent=55 // pred_check_branch
          %376 = sbr.rel (%p374) target = $region60
        $region59: #{tpu_custom_call.1} parent=55 // pred_region
          %p377 = scmp.lt.s32.totalorder %s23, 1
          %s378 = scalar_select %p377, %s23, 1
          %s379 = smul.addr %s378, 8
          %s380 = smul.addr %s379, 8
          %s381 = scalar_lea.vmem %s0, %s380
        $region60: #{tpu_custom_call.1} parent=55 // pred_fallthru
          _
      $region56: #{tpu_custom_call.1} parent=5 // pred_fallthru
        _
      %p382 = scmp.le.s32.totalorder 1, %s23
      %p383 = scmp.lt.s32.totalorder %s23, 3
      %p384 = pnand %p382, %p383
      %p385 = pneg %p384
      // Predicated region
      $region61: #{tpu_custom_call.1} parent=5 // pred_check
        _
      $region62: #{tpu_custom_call.1} parent=5 // pred_check_branch
        %387 = sbr.rel (%p384) target = $region64
      $region63: #{tpu_custom_call.1} parent=5 // pred_region
        %s388 = ssub.s32 %s23, 1
        // Predicated region
        $region65: #{tpu_custom_call.1} parent=63 // pred_check
          %p389 = pneg %p70
        $region66: #{tpu_custom_call.1} parent=63 // pred_check_branch
          %391 = sbr.rel (%p389) target = $region68
        $region67: #{tpu_custom_call.1} parent=63 // pred_region
          %392 = dma.done [#allocation4], 2048
        $region68: #{tpu_custom_call.1} parent=63 // pred_fallthru
          _
        // Predicated region
        $region69: #{tpu_custom_call.1} parent=63 // pred_check
          %p393 = pneg %p112
        $region70: #{tpu_custom_call.1} parent=63 // pred_check_branch
          %395 = sbr.rel (%p393) target = $region72
        $region71: #{tpu_custom_call.1} parent=63 // pred_region
          %396 = dma.done [#allocation7], 18432
        $region72: #{tpu_custom_call.1} parent=63 // pred_fallthru
          _
        // Predicated region
        $region73: #{tpu_custom_call.1} parent=63 // pred_check
          %p397 = pneg %p154
        $region74: #{tpu_custom_call.1} parent=63 // pred_check_branch
          %399 = sbr.rel (%p397) target = $region76
        $region75: #{tpu_custom_call.1} parent=63 // pred_region
          %400 = dma.done [#allocation7], 2048
        $region76: #{tpu_custom_call.1} parent=63 // pred_fallthru
          _
        // Predicated region
        $region77: #{tpu_custom_call.1} parent=63 // pred_check
          %p401 = pneg %p196
        $region78: #{tpu_custom_call.1} parent=63 // pred_check_branch
          %403 = sbr.rel (%p401) target = $region80
        $region79: #{tpu_custom_call.1} parent=63 // pred_region
          %404 = dma.done [#allocation10], 2048
        $region80: #{tpu_custom_call.1} parent=63 // pred_fallthru
          _
        %p405 = scmp.lt.s32.totalorder %s28, 1
        %s406 = scalar_select %p405, %s28, 1
        %s407 = smul.addr %s406, 8
        %s408 = smul.addr %s407, 8
        %s409 = scalar_lea.vmem %s0, %s408
        %p410 = pneg %p49
        %p411 = pneg %p46
        %p412 = pneg %p70
        %p413 = pneg %p67
        %p414 = pneg %p91
        %p415 = pneg %p88
        %p416 = pneg %p112
        %p417 = pneg %p109
        %p418 = pneg %p133
        %p419 = pneg %p130
        %p420 = pneg %p154
        %p421 = pneg %p151
        %p422 = pneg %p175
        %p423 = pneg %p172
        %p424 = pneg %p196
        %p425 = pneg %p193
        %p426 = pneg %p217
        %p427 = pneg %p214
        %p428 = pneg %p238
        %p429 = pneg %p235
        %p430 = pneg %p259
        %p431 = pneg %p256
        %p432 = pneg %p285
        %p433 = pneg %p282
        %s434 = sand.u32 %s272, 1
        %s435 = scalar_lea.sflag [#allocation5], %s434
        %s436 = sand.u32 %s272, 1
        %s437 = smul.addr %s436, 64
        %s438 = scalar_lea.vmem [#allocation11], %s437
        %p439 = scmp.lt.s32.totalorder %s28, 1
        %s440 = scalar_select %p439, %s28, 1
        %s441 = smul.addr %s440, 8
        %s442 = smul.addr %s441, 8
        %s443 = scalar_lea.vmem %s0, %s442
        %v444 = vld [vmem:[%s443] sm:$0xff]
        %v445 = vld [vmem:[%s443 + $0x8] sm:$0xff]
        %v446 = vld [vmem:[%s443 + $0x10] sm:$0xff]
        %v447 = vld [vmem:[%s443 + $0x18] sm:$0xff]
        %v448 = vld [vmem:[%s443 + $0x20] sm:$0xff]
        %v449 = vld [vmem:[%s443 + $0x28] sm:$0xff]
        %v450 = vld [vmem:[%s443 + $0x30] sm:$0xff]
        %v451 = vld [vmem:[%s443 + $0x38] sm:$0xff]
        %v452 = vld [vmem:[#allocation3] sm:$0xff]
        %v453 = vld [vmem:[#allocation3 + $0x8] sm:$0xff]
        %v454 = vld [vmem:[#allocation3 + $0x10] sm:$0xff]
        %v455 = vld [vmem:[#allocation3 + $0x18] sm:$0xff]
        %v456 = vld [vmem:[#allocation3 + $0x20] sm:$0xff]
        %v457 = vld [vmem:[#allocation3 + $0x28] sm:$0xff]
        %v458 = vld [vmem:[#allocation3 + $0x30] sm:$0xff]
        %v459 = vld [vmem:[#allocation3 + $0x38] sm:$0xff]
        %v460 = vld [vmem:[#allocation3 + $0x40] sm:$0xff]
        %v461 = vld [vmem:[#allocation3 + $0x48] sm:$0xff]
        %v462 = vld [vmem:[#allocation3 + $0x50] sm:$0xff]
        %v463 = vld [vmem:[#allocation3 + $0x58] sm:$0xff]
        %v464 = vld [vmem:[#allocation3 + $0x60] sm:$0xff]
        %v465 = vld [vmem:[#allocation3 + $0x68] sm:$0xff]
        %v466 = vld [vmem:[#allocation3 + $0x70] sm:$0xff]
        %v467 = vld [vmem:[#allocation3 + $0x78] sm:$0xff]
        %v468 = vld [vmem:[%s2] sm:$0x1]
        %v470 = vlaneseq
        %v471 = vshrl.u32 %v470, 7
        %v472 = vsub.s32 0, %v471
        %v473 = vrot.slane %v468, %v472
        %475 = vmatprep.subr.mxu0 0.0
        %476 = vmatpush1.msra.mxu0 %v452
        %477 = vmatprep.subr.mxu0 0.0
        %478 = vmatpush1.msra.mxu0 %v453
        %479 = vmatprep.subr.mxu0 0.0
        %480 = vmatpush1.msra.mxu0 %v454
        %481 = vmatprep.subr.mxu0 0.0
        %482 = vmatpush1.msra.mxu0 %v455
        %483 = vmatprep.subr.mxu0 0.0
        %484 = vmatpush1.msra.mxu0 %v456
        %485 = vmatprep.subr.mxu0 0.0
        %486 = vmatpush1.msra.mxu0 %v457
        %487 = vmatprep.subr.mxu0 0.0
        %488 = vmatpush1.msra.mxu0 %v458
        %489 = vmatprep.subr.mxu0 0.0
        %490 = vmatpush1.msra.mxu0 %v459
        %491 = vmatprep.subr.mxu0 0.0
        %492 = vmatpush1.msra.mxu0 %v460
        %493 = vmatprep.subr.mxu0 0.0
        %494 = vmatpush1.msra.mxu0 %v461
        %495 = vmatprep.subr.mxu0 0.0
        %496 = vmatpush1.msra.mxu0 %v462
        %497 = vmatprep.subr.mxu0 0.0
        %498 = vmatpush1.msra.mxu0 %v463
        %499 = vmatprep.subr.mxu0 0.0
        %500 = vmatpush1.msra.mxu0 %v464
        %501 = vmatprep.subr.mxu0 0.0
        %502 = vmatpush1.msra.mxu0 %v465
        %503 = vmatprep.subr.mxu0 0.0
        %504 = vmatpush1.msra.mxu0 %v466
        %505 = vmatprep.subr.mxu0 0.0
        %506 = vmatpush1.msra.mxu0 %v467
        %507 = vmatprep.subr.mxu0 0.0
        %508 = vmatpush1.msra.mxu0 0.0
        %509 = vmatprep.subr.mxu0 0.0
        %510 = vmatpush1.msra.mxu0 0.0
        %511 = vmatprep.subr.mxu0 0.0
        %512 = vmatpush1.msra.mxu0 0.0
        %513 = vmatprep.subr.mxu0 0.0
        %514 = vmatpush1.msra.mxu0 0.0
        %515 = vmatprep.subr.mxu0 0.0
        %516 = vmatpush1.msra.mxu0 0.0
        %517 = vmatprep.subr.mxu0 0.0
        %518 = vmatpush1.msra.mxu0 0.0
        %519 = vmatprep.subr.mxu0 0.0
        %520 = vmatpush1.msra.mxu0 0.0
        %521 = vmatprep.subr.mxu0 0.0
        %522 = vmatpush1.msra.mxu0 0.0
        %523 = vmatprep.subr.mxu0 0.0
        %524 = vmatpush1.msra.mxu0 0.0
        %525 = vmatprep.subr.mxu0 0.0
        %526 = vmatpush1.msra.mxu0 0.0
        %527 = vmatprep.subr.mxu0 0.0
        %528 = vmatpush1.msra.mxu0 0.0
        %529 = vmatprep.subr.mxu0 0.0
        %530 = vmatpush1.msra.mxu0 0.0
        %531 = vmatprep.subr.mxu0 0.0
        %532 = vmatpush1.msra.mxu0 0.0
        %533 = vmatprep.subr.mxu0 0.0
        %534 = vmatpush1.msra.mxu0 0.0
        %535 = vmatprep.subr.mxu0 0.0
        %536 = vmatpush1.msra.mxu0 0.0
        %537 = vmatprep.subr.mxu0 0.0
        %538 = vmatpush1.msra.mxu0 0.0
        %539 = vmatprep.mubr.f32.mxu0 0.0
        %540 = vmatmul.mubr.f32.gmra.mrb[0].mxu0 %v444
        %v541 = vpop.f32.mrb[0].mxu0
        %v542 = vadd.f32 %v473, %v541
        %v543 = vpop.f32.mrb[0].mxu0
        %544 = vmatprep.mubr.f32.mxu0 0.0
        %545 = vmatmul.mubr.f32.gmra.mrb[0].mxu0 %v445
        %v546 = vpop.f32.mrb[0].mxu0
        %v547 = vadd.f32 %v473, %v546
        %v548 = vpop.f32.mrb[0].mxu0
        %549 = vmatprep.mubr.f32.mxu0 0.0
        %550 = vmatmul.mubr.f32.gmra.mrb[0].mxu0 %v446
        %v551 = vpop.f32.mrb[0].mxu0
        %v552 = vadd.f32 %v473, %v551
        %v553 = vpop.f32.mrb[0].mxu0
        %554 = vmatprep.mubr.f32.mxu0 0.0
        %555 = vmatmul.mubr.f32.gmra.mrb[0].mxu0 %v447
        %v556 = vpop.f32.mrb[0].mxu0
        %v557 = vadd.f32 %v473, %v556
        %v558 = vpop.f32.mrb[0].mxu0
        %559 = vmatprep.mubr.f32.mxu0 0.0
        %560 = vmatmul.mubr.f32.gmra.mrb[0].mxu0 %v448
        %v561 = vpop.f32.mrb[0].mxu0
        %v562 = vadd.f32 %v473, %v561
        %v563 = vpop.f32.mrb[0].mxu0
        %564 = vmatprep.mubr.f32.mxu0 0.0
        %565 = vmatmul.mubr.f32.gmra.mrb[0].mxu0 %v449
        %v566 = vpop.f32.mrb[0].mxu0
        %v567 = vadd.f32 %v473, %v566
        %v568 = vpop.f32.mrb[0].mxu0
        %569 = vmatprep.mubr.f32.mxu0 0.0
        %570 = vmatmul.mubr.f32.gmra.mrb[0].mxu0 %v450
        %v571 = vpop.f32.mrb[0].mxu0
        %v572 = vadd.f32 %v473, %v571
        %v573 = vpop.f32.mrb[0].mxu0
        %574 = vmatprep.mubr.f32.mxu0 0.0
        %575 = vmatmul.mubr.f32.gmra.mrb[0].mxu0 %v451
        %v576 = vpop.f32.mrb[0].mxu0
        %v577 = vadd.f32 %v473, %v576
        %v578 = vpop.f32.mrb[0].mxu0
        %579 = vdwg.mxu0
        %v580 = vmax.f32 %v542, 0.0
        %v581 = vmax.f32 %v547, 0.0
        %v582 = vmax.f32 %v552, 0.0
        %v583 = vmax.f32 %v557, 0.0
        %v584 = vmax.f32 %v562, 0.0
        %v585 = vmax.f32 %v567, 0.0
        %v586 = vmax.f32 %v572, 0.0
        %v587 = vmax.f32 %v577, 0.0
        %588 = vst [vmem:[#allocation2] sm:$0xff] 0.0
        %589 = vst [vmem:[#allocation2 + $0x8] sm:$0xff] 0.0
        %590 = vst [vmem:[#allocation2 + $0x50] sm:$0xff] 0.0
        %591 = vst [vmem:[#allocation2 + $0x58] sm:$0xff] 0.0
        %592 = vst [vmem:[#allocation2 + $0x10] sm:$0xff] %v580
        %593 = vst [vmem:[#allocation2 + $0x18] sm:$0xff] %v581
        %594 = vst [vmem:[#allocation2 + $0x20] sm:$0xff] %v582
        %595 = vst [vmem:[#allocation2 + $0x28] sm:$0xff] %v583
        %596 = vst [vmem:[#allocation2 + $0x30] sm:$0xff] %v584
        %597 = vst [vmem:[#allocation2 + $0x38] sm:$0xff] %v585
        %598 = vst [vmem:[#allocation2 + $0x40] sm:$0xff] %v586
        %599 = vst [vmem:[#allocation2 + $0x48] sm:$0xff] %v587
        %v600 = vld [vmem:[%s9] sm:$0xff]
        %v601 = vld [vmem:[%s9 + $0x8] sm:$0xff]
        %v602 = vld [vmem:[%s9 + $0x10] sm:$0xff]
        %v603 = vld [vmem:[%s9 + $0x18] sm:$0xff]
        %v604 = vld [vmem:[%s9 + $0x20] sm:$0xff]
        %v605 = vld [vmem:[%s9 + $0x28] sm:$0xff]
        %v606 = vld [vmem:[%s9 + $0x30] sm:$0xff]
        %v607 = vld [vmem:[%s9 + $0x38] sm:$0xff]
        %v608 = vld [vmem:[%s10] sm:$0xff]
        %v609 = vld [vmem:[%s10 + $0x8] sm:$0xff]
        %v610 = vld [vmem:[%s10 + $0x10] sm:$0xff]
        %v611 = vld [vmem:[%s10 + $0x18] sm:$0xff]
        %v612 = vld [vmem:[%s10 + $0x20] sm:$0xff]
        %v613 = vld [vmem:[%s10 + $0x28] sm:$0xff]
        %v614 = vld [vmem:[%s10 + $0x30] sm:$0xff]
        %v615 = vld [vmem:[%s10 + $0x38] sm:$0xff]
        %v616 = vld [vmem:[#allocation2 + $0x7] sm:$0xff]
        %v617 = vld [vmem:[#allocation2 + $0xf] sm:$0xff]
        %v618 = vld [vmem:[#allocation2 + $0x17] sm:$0xff]
        %v619 = vld [vmem:[#allocation2 + $0x1f] sm:$0xff]
        %v620 = vld [vmem:[#allocation2 + $0x27] sm:$0xff]
        %v621 = vld [vmem:[#allocation2 + $0x2f] sm:$0xff]
        %v622 = vld [vmem:[#allocation2 + $0x37] sm:$0xff]
        %v623 = vld [vmem:[#allocation2 + $0x3f] sm:$0xff]
        %625 = vset.pattern.permute.xlu0 0
        %626 = vperm.xlu0 %625, %v600
        %v627 = vpop.permute.xlu0 %626
        %630 = vset.pattern.permute.xlu0 0
        %631 = vperm.xlu0 %630, %v601
        %v632 = vpop.permute.xlu0 %631
        %635 = vset.pattern.permute.xlu0 0
        %636 = vperm.xlu0 %635, %v602
        %v637 = vpop.permute.xlu0 %636
        %640 = vset.pattern.permute.xlu0 0
        %641 = vperm.xlu0 %640, %v603
        %v642 = vpop.permute.xlu0 %641
        %645 = vset.pattern.permute.xlu0 0
        %646 = vperm.xlu0 %645, %v604
        %v647 = vpop.permute.xlu0 %646
        %650 = vset.pattern.permute.xlu0 0
        %651 = vperm.xlu0 %650, %v605
        %v652 = vpop.permute.xlu0 %651
        %655 = vset.pattern.permute.xlu0 0
        %656 = vperm.xlu0 %655, %v606
        %v657 = vpop.permute.xlu0 %656
        %660 = vset.pattern.permute.xlu0 0
        %661 = vperm.xlu0 %660, %v607
        %v662 = vpop.permute.xlu0 %661
        %v664 = vmul.f32 %v616, %v627
        %v665 = vmul.f32 %v617, %v632
        %v666 = vmul.f32 %v618, %v637
        %v667 = vmul.f32 %v619, %v642
        %v668 = vmul.f32 %v620, %v647
        %v669 = vmul.f32 %v621, %v652
        %v670 = vmul.f32 %v622, %v657
        %v671 = vmul.f32 %v623, %v662
        %v672 = vld [vmem:[#allocation6] sm:$0xff]
        %v673 = vld [vmem:[#allocation6 + $0x8] sm:$0xff]
        %v674 = vld [vmem:[#allocation6 + $0x10] sm:$0xff]
        %v675 = vld [vmem:[#allocation6 + $0x18] sm:$0xff]
        %v676 = vld [vmem:[#allocation6 + $0x20] sm:$0xff]
        %v677 = vld [vmem:[#allocation6 + $0x28] sm:$0xff]
        %v678 = vld [vmem:[#allocation6 + $0x30] sm:$0xff]
        %v679 = vld [vmem:[#allocation6 + $0x38] sm:$0xff]
        %v680 = vld [vmem:[#allocation6 + $0x40] sm:$0xff]
        %v681 = vld [vmem:[#allocation6 + $0x48] sm:$0xff]
        %v682 = vld [vmem:[#allocation6 + $0x50] sm:$0xff]
        %v683 = vld [vmem:[#allocation6 + $0x58] sm:$0xff]
        %v684 = vld [vmem:[#allocation6 + $0x60] sm:$0xff]
        %v685 = vld [vmem:[#allocation6 + $0x68] sm:$0xff]
        %v686 = vld [vmem:[#allocation6 + $0x70] sm:$0xff]
        %v687 = vld [vmem:[#allocation6 + $0x78] sm:$0xff]
        %v688 = vld [vmem:[#allocation2 + $0x8] sm:$0xff]
        %v689 = vld [vmem:[#allocation2 + $0x10] sm:$0xff]
        %v690 = vld [vmem:[#allocation2 + $0x18] sm:$0xff]
        %v691 = vld [vmem:[#allocation2 + $0x20] sm:$0xff]
        %v692 = vld [vmem:[#allocation2 + $0x28] sm:$0xff]
        %v693 = vld [vmem:[#allocation2 + $0x30] sm:$0xff]
        %v694 = vld [vmem:[#allocation2 + $0x38] sm:$0xff]
        %v695 = vld [vmem:[#allocation2 + $0x40] sm:$0xff]
        %v696 = vld [vmem:[#allocation6 + $0x80] sm:$0xff]
        %v697 = vld [vmem:[#allocation6 + $0x88] sm:$0xff]
        %v698 = vld [vmem:[#allocation6 + $0x90] sm:$0xff]
        %v699 = vld [vmem:[#allocation6 + $0x98] sm:$0xff]
        %v700 = vld [vmem:[#allocation6 + $0xa0] sm:$0xff]
        %v701 = vld [vmem:[#allocation6 + $0xa8] sm:$0xff]
        %v702 = vld [vmem:[#allocation6 + $0xb0] sm:$0xff]
        %v703 = vld [vmem:[#allocation6 + $0xb8] sm:$0xff]
        %v704 = vld [vmem:[#allocation6 + $0xc0] sm:$0xff]
        %v705 = vld [vmem:[#allocation6 + $0xc8] sm:$0xff]
        %v706 = vld [vmem:[#allocation6 + $0xd0] sm:$0xff]
        %v707 = vld [vmem:[#allocation6 + $0xd8] sm:$0xff]
        %v708 = vld [vmem:[#allocation6 + $0xe0] sm:$0xff]
        %v709 = vld [vmem:[#allocation6 + $0xe8] sm:$0xff]
        %v710 = vld [vmem:[#allocation6 + $0xf0] sm:$0xff]
        %v711 = vld [vmem:[#allocation6 + $0xf8] sm:$0xff]
        %712 = vmatprep.subr.mxu0 0.0
        %713 = vmatpush1.msra.mxu0 %v696
        %714 = vmatprep.subr.mxu0 0.0
        %715 = vmatpush1.msra.mxu0 %v697
        %716 = vmatprep.subr.mxu0 0.0
        %717 = vmatpush1.msra.mxu0 %v698
        %718 = vmatprep.subr.mxu0 0.0
        %719 = vmatpush1.msra.mxu0 %v699
        %720 = vmatprep.subr.mxu0 0.0
        %721 = vmatpush1.msra.mxu0 %v700
        %722 = vmatprep.subr.mxu0 0.0
        %723 = vmatpush1.msra.mxu0 %v701
        %724 = vmatprep.subr.mxu0 0.0
        %725 = vmatpush1.msra.mxu0 %v702
        %726 = vmatprep.subr.mxu0 0.0
        %727 = vmatpush1.msra.mxu0 %v703
        %728 = vmatprep.subr.mxu0 0.0
        %729 = vmatpush1.msra.mxu0 %v704
        %730 = vmatprep.subr.mxu0 0.0
        %731 = vmatpush1.msra.mxu0 %v705
        %732 = vmatprep.subr.mxu0 0.0
        %733 = vmatpush1.msra.mxu0 %v706
        %734 = vmatprep.subr.mxu0 0.0
        %735 = vmatpush1.msra.mxu0 %v707
        %736 = vmatprep.subr.mxu0 0.0
        %737 = vmatpush1.msra.mxu0 %v708
        %738 = vmatprep.subr.mxu0 0.0
        %739 = vmatpush1.msra.mxu0 %v709
        %740 = vmatprep.subr.mxu0 0.0
        %741 = vmatpush1.msra.mxu0 %v710
        %742 = vmatprep.subr.mxu0 0.0
        %743 = vmatpush1.msra.mxu0 %v711
        %744 = vmatprep.subr.mxu0 0.0
        %745 = vmatpush1.msra.mxu0 0.0
        %746 = vmatprep.subr.mxu0 0.0
        %747 = vmatpush1.msra.mxu0 0.0
        %748 = vmatprep.subr.mxu0 0.0
        %749 = vmatpush1.msra.mxu0 0.0
        %750 = vmatprep.subr.mxu0 0.0
        %751 = vmatpush1.msra.mxu0 0.0
        %752 = vmatprep.subr.mxu0 0.0
        %753 = vmatpush1.msra.mxu0 0.0
        %754 = vmatprep.subr.mxu0 0.0
        %755 = vmatpush1.msra.mxu0 0.0
        %756 = vmatprep.subr.mxu0 0.0
        %757 = vmatpush1.msra.mxu0 0.0
        %758 = vmatprep.subr.mxu0 0.0
        %759 = vmatpush1.msra.mxu0 0.0
        %760 = vmatprep.subr.mxu0 0.0
        %761 = vmatpush1.msra.mxu0 0.0
        %762 = vmatprep.subr.mxu0 0.0
        %763 = vmatpush1.msra.mxu0 0.0
        %764 = vmatprep.subr.mxu0 0.0
        %765 = vmatpush1.msra.mxu0 0.0
        %766 = vmatprep.subr.mxu0 0.0
        %767 = vmatpush1.msra.mxu0 0.0
        %768 = vmatprep.subr.mxu0 0.0
        %769 = vmatpush1.msra.mxu0 0.0
        %770 = vmatprep.subr.mxu0 0.0
        %771 = vmatpush1.msra.mxu0 0.0
        %772 = vmatprep.subr.mxu0 0.0
        %773 = vmatpush1.msra.mxu0 0.0
        %774 = vmatprep.subr.mxu0 0.0
        %775 = vmatpush1.msra.mxu0 0.0
        %776 = vmatprep.mubr.f32.mxu0 0.0
        %777 = vmatmul.mubr.f32.gmra.mrb[0].mxu0 %v688
        %v778 = vpop.f32.mrb[0].mxu0
        %v779 = vadd.f32 0.0, %v778
        %v780 = vpop.f32.mrb[0].mxu0
        %781 = vmatprep.mubr.f32.mxu0 0.0
        %782 = vmatmul.mubr.f32.gmra.mrb[0].mxu0 %v689
        %v783 = vpop.f32.mrb[0].mxu0
        %v784 = vadd.f32 0.0, %v783
        %v785 = vpop.f32.mrb[0].mxu0
        %786 = vmatprep.mubr.f32.mxu0 0.0
        %787 = vmatmul.mubr.f32.gmra.mrb[0].mxu0 %v690
        %v788 = vpop.f32.mrb[0].mxu0
        %v789 = vadd.f32 0.0, %v788
        %v790 = vpop.f32.mrb[0].mxu0
        %791 = vmatprep.mubr.f32.mxu0 0.0
        %792 = vmatmul.mubr.f32.gmra.mrb[0].mxu0 %v691
        %v793 = vpop.f32.mrb[0].mxu0
        %v794 = vadd.f32 0.0, %v793
        %v795 = vpop.f32.mrb[0].mxu0
        %796 = vmatprep.mubr.f32.mxu0 0.0
        %797 = vmatmul.mubr.f32.gmra.mrb[0].mxu0 %v692
        %v798 = vpop.f32.mrb[0].mxu0
        %v799 = vadd.f32 0.0, %v798
        %v800 = vpop.f32.mrb[0].mxu0
        %801 = vmatprep.mubr.f32.mxu0 0.0
        %802 = vmatmul.mubr.f32.gmra.mrb[0].mxu0 %v693
        %v803 = vpop.f32.mrb[0].mxu0
        %v804 = vadd.f32 0.0, %v803
        %v805 = vpop.f32.mrb[0].mxu0
        %806 = vmatprep.mubr.f32.mxu0 0.0
        %807 = vmatmul.mubr.f32.gmra.mrb[0].mxu0 %v694
        %v808 = vpop.f32.mrb[0].mxu0
        %v809 = vadd.f32 0.0, %v808
        %v810 = vpop.f32.mrb[0].mxu0
        %811 = vmatprep.mubr.f32.mxu0 0.0
        %812 = vmatmul.mubr.f32.gmra.mrb[0].mxu0 %v695
        %v813 = vpop.f32.mrb[0].mxu0
        %v814 = vadd.f32 0.0, %v813
        %v815 = vpop.f32.mrb[0].mxu0
        %816 = vdwg.mxu0
        %817 = vmatprep.subr.mxu0 0.0
        %818 = vmatpush1.msra.mxu0 %v672
        %819 = vmatprep.subr.mxu0 0.0
        %820 = vmatpush1.msra.mxu0 %v673
        %821 = vmatprep.subr.mxu0 0.0
        %822 = vmatpush1.msra.mxu0 %v674
        %823 = vmatprep.subr.mxu0 0.0
        %824 = vmatpush1.msra.mxu0 %v675
        %825 = vmatprep.subr.mxu0 0.0
        %826 = vmatpush1.msra.mxu0 %v676
        %827 = vmatprep.subr.mxu0 0.0
        %828 = vmatpush1.msra.mxu0 %v677
        %829 = vmatprep.subr.mxu0 0.0
        %830 = vmatpush1.msra.mxu0 %v678
        %831 = vmatprep.subr.mxu0 0.0
        %832 = vmatpush1.msra.mxu0 %v679
        %833 = vmatprep.subr.mxu0 0.0
        %834 = vmatpush1.msra.mxu0 %v680
        %835 = vmatprep.subr.mxu0 0.0
        %836 = vmatpush1.msra.mxu0 %v681
        %837 = vmatprep.subr.mxu0 0.0
        %838 = vmatpush1.msra.mxu0 %v682
        %839 = vmatprep.subr.mxu0 0.0
        %840 = vmatpush1.msra.mxu0 %v683
        %841 = vmatprep.subr.mxu0 0.0
        %842 = vmatpush1.msra.mxu0 %v684
        %843 = vmatprep.subr.mxu0 0.0
        %844 = vmatpush1.msra.mxu0 %v685
        %845 = vmatprep.subr.mxu0 0.0
        %846 = vmatpush1.msra.mxu0 %v686
        %847 = vmatprep.subr.mxu0 0.0
        %848 = vmatpush1.msra.mxu0 %v687
        %849 = vmatprep.subr.mxu0 0.0
        %850 = vmatpush1.msra.mxu0 0.0
        %851 = vmatprep.subr.mxu0 0.0
        %852 = vmatpush1.msra.mxu0 0.0
        %853 = vmatprep.subr.mxu0 0.0
        %854 = vmatpush1.msra.mxu0 0.0
        %855 = vmatprep.subr.mxu0 0.0
        %856 = vmatpush1.msra.mxu0 0.0
        %857 = vmatprep.subr.mxu0 0.0
        %858 = vmatpush1.msra.mxu0 0.0
        %859 = vmatprep.subr.mxu0 0.0
        %860 = vmatpush1.msra.mxu0 0.0
        %861 = vmatprep.subr.mxu0 0.0
        %862 = vmatpush1.msra.mxu0 0.0
        %863 = vmatprep.subr.mxu0 0.0
        %864 = vmatpush1.msra.mxu0 0.0
        %865 = vmatprep.subr.mxu0 0.0
        %866 = vmatpush1.msra.mxu0 0.0
        %867 = vmatprep.subr.mxu0 0.0
        %868 = vmatpush1.msra.mxu0 0.0
        %869 = vmatprep.subr.mxu0 0.0
        %870 = vmatpush1.msra.mxu0 0.0
        %871 = vmatprep.subr.mxu0 0.0
        %872 = vmatpush1.msra.mxu0 0.0
        %873 = vmatprep.subr.mxu0 0.0
        %874 = vmatpush1.msra.mxu0 0.0
        %875 = vmatprep.subr.mxu0 0.0
        %876 = vmatpush1.msra.mxu0 0.0
        %877 = vmatprep.subr.mxu0 0.0
        %878 = vmatpush1.msra.mxu0 0.0
        %879 = vmatprep.subr.mxu0 0.0
        %880 = vmatpush1.msra.mxu0 0.0
        %881 = vmatprep.mubr.f32.mxu0 0.0
        %882 = vmatmul.mubr.f32.gmra.mrb[0].mxu0 %v664
        %v883 = vpop.f32.mrb[0].mxu0
        %v884 = vadd.f32 %v779, %v883
        %v885 = vpop.f32.mrb[0].mxu0
        %886 = vmatprep.mubr.f32.mxu0 0.0
        %887 = vmatmul.mubr.f32.gmra.mrb[0].mxu0 %v665
        %v888 = vpop.f32.mrb[0].mxu0
        %v889 = vadd.f32 %v784, %v888
        %v890 = vpop.f32.mrb[0].mxu0
        %891 = vmatprep.mubr.f32.mxu0 0.0
        %892 = vmatmul.mubr.f32.gmra.mrb[0].mxu0 %v666
        %v893 = vpop.f32.mrb[0].mxu0
        %v894 = vadd.f32 %v789, %v893
        %v895 = vpop.f32.mrb[0].mxu0
        %896 = vmatprep.mubr.f32.mxu0 0.0
        %897 = vmatmul.mubr.f32.gmra.mrb[0].mxu0 %v667
        %v898 = vpop.f32.mrb[0].mxu0
        %v899 = vadd.f32 %v794, %v898
        %v900 = vpop.f32.mrb[0].mxu0
        %901 = vmatprep.mubr.f32.mxu0 0.0
        %902 = vmatmul.mubr.f32.gmra.mrb[0].mxu0 %v668
        %v903 = vpop.f32.mrb[0].mxu0
        %v904 = vadd.f32 %v799, %v903
        %v905 = vpop.f32.mrb[0].mxu0
        %906 = vmatprep.mubr.f32.mxu0 0.0
        %907 = vmatmul.mubr.f32.gmra.mrb[0].mxu0 %v669
        %v908 = vpop.f32.mrb[0].mxu0
        %v909 = vadd.f32 %v804, %v908
        %v910 = vpop.f32.mrb[0].mxu0
        %911 = vmatprep.mubr.f32.mxu0 0.0
        %912 = vmatmul.mubr.f32.gmra.mrb[0].mxu0 %v670
        %v913 = vpop.f32.mrb[0].mxu0
        %v914 = vadd.f32 %v809, %v913
        %v915 = vpop.f32.mrb[0].mxu0
        %916 = vmatprep.mubr.f32.mxu0 0.0
        %917 = vmatmul.mubr.f32.gmra.mrb[0].mxu0 %v671
        %v918 = vpop.f32.mrb[0].mxu0
        %v919 = vadd.f32 %v814, %v918
        %v920 = vpop.f32.mrb[0].mxu0
        %921 = vdwg.mxu0
        %v922 = vld [vmem:[#allocation2 + $0x9] sm:$0xff]
        %v923 = vld [vmem:[#allocation2 + $0x11] sm:$0xff]
        %v924 = vld [vmem:[#allocation2 + $0x19] sm:$0xff]
        %v925 = vld [vmem:[#allocation2 + $0x21] sm:$0xff]
        %v926 = vld [vmem:[#allocation2 + $0x29] sm:$0xff]
        %v927 = vld [vmem:[#allocation2 + $0x31] sm:$0xff]
        %v928 = vld [vmem:[#allocation2 + $0x39] sm:$0xff]
        %v929 = vld [vmem:[#allocation2 + $0x41] sm:$0xff]
        %931 = vset.pattern.permute.xlu0 0
        %932 = vperm.xlu0 %931, %v608
        %v933 = vpop.permute.xlu0 %932
        %936 = vset.pattern.permute.xlu0 0
        %937 = vperm.xlu0 %936, %v609
        %v938 = vpop.permute.xlu0 %937
        %941 = vset.pattern.permute.xlu0 0
        %942 = vperm.xlu0 %941, %v610
        %v943 = vpop.permute.xlu0 %942
        %946 = vset.pattern.permute.xlu0 0
        %947 = vperm.xlu0 %946, %v611
        %v948 = vpop.permute.xlu0 %947
        %951 = vset.pattern.permute.xlu0 0
        %952 = vperm.xlu0 %951, %v612
        %v953 = vpop.permute.xlu0 %952
        %956 = vset.pattern.permute.xlu0 0
        %957 = vperm.xlu0 %956, %v613
        %v958 = vpop.permute.xlu0 %957
        %961 = vset.pattern.permute.xlu0 0
        %962 = vperm.xlu0 %961, %v614
        %v963 = vpop.permute.xlu0 %962
        %966 = vset.pattern.permute.xlu0 0
        %967 = vperm.xlu0 %966, %v615
        %v968 = vpop.permute.xlu0 %967
        %v970 = vmul.f32 %v922, %v933
        %v971 = vmul.f32 %v923, %v938
        %v972 = vmul.f32 %v924, %v943
        %v973 = vmul.f32 %v925, %v948
        %v974 = vmul.f32 %v926, %v953
        %v975 = vmul.f32 %v927, %v958
        %v976 = vmul.f32 %v928, %v963
        %v977 = vmul.f32 %v929, %v968
        %v978 = vld [vmem:[#allocation6 + $0x100] sm:$0xff]
        %v979 = vld [vmem:[#allocation6 + $0x108] sm:$0xff]
        %v980 = vld [vmem:[#allocation6 + $0x110] sm:$0xff]
        %v981 = vld [vmem:[#allocation6 + $0x118] sm:$0xff]
        %v982 = vld [vmem:[#allocation6 + $0x120] sm:$0xff]
        %v983 = vld [vmem:[#allocation6 + $0x128] sm:$0xff]
        %v984 = vld [vmem:[#allocation6 + $0x130] sm:$0xff]
        %v985 = vld [vmem:[#allocation6 + $0x138] sm:$0xff]
        %v986 = vld [vmem:[#allocation6 + $0x140] sm:$0xff]
        %v987 = vld [vmem:[#allocation6 + $0x148] sm:$0xff]
        %v988 = vld [vmem:[#allocation6 + $0x150] sm:$0xff]
        %v989 = vld [vmem:[#allocation6 + $0x158] sm:$0xff]
        %v990 = vld [vmem:[#allocation6 + $0x160] sm:$0xff]
        %v991 = vld [vmem:[#allocation6 + $0x168] sm:$0xff]
        %v992 = vld [vmem:[#allocation6 + $0x170] sm:$0xff]
        %v993 = vld [vmem:[#allocation6 + $0x178] sm:$0xff]
        %994 = vmatprep.subr.mxu0 0.0
        %995 = vmatpush1.msra.mxu0 %v978
        %996 = vmatprep.subr.mxu0 0.0
        %997 = vmatpush1.msra.mxu0 %v979
        %998 = vmatprep.subr.mxu0 0.0
        %999 = vmatpush1.msra.mxu0 %v980
        %1000 = vmatprep.subr.mxu0 0.0
        %1001 = vmatpush1.msra.mxu0 %v981
        %1002 = vmatprep.subr.mxu0 0.0
        %1003 = vmatpush1.msra.mxu0 %v982
        %1004 = vmatprep.subr.mxu0 0.0
        %1005 = vmatpush1.msra.mxu0 %v983
        %1006 = vmatprep.subr.mxu0 0.0
        %1007 = vmatpush1.msra.mxu0 %v984
        %1008 = vmatprep.subr.mxu0 0.0
        %1009 = vmatpush1.msra.mxu0 %v985
        %1010 = vmatprep.subr.mxu0 0.0
        %1011 = vmatpush1.msra.mxu0 %v986
        %1012 = vmatprep.subr.mxu0 0.0
        %1013 = vmatpush1.msra.mxu0 %v987
        %1014 = vmatprep.subr.mxu0 0.0
        %1015 = vmatpush1.msra.mxu0 %v988
        %1016 = vmatprep.subr.mxu0 0.0
        %1017 = vmatpush1.msra.mxu0 %v989
        %1018 = vmatprep.subr.mxu0 0.0
        %1019 = vmatpush1.msra.mxu0 %v990
        %1020 = vmatprep.subr.mxu0 0.0
        %1021 = vmatpush1.msra.mxu0 %v991
        %1022 = vmatprep.subr.mxu0 0.0
        %1023 = vmatpush1.msra.mxu0 %v992
        %1024 = vmatprep.subr.mxu0 0.0
        %1025 = vmatpush1.msra.mxu0 %v993
        %1026 = vmatprep.subr.mxu0 0.0
        %1027 = vmatpush1.msra.mxu0 0.0
        %1028 = vmatprep.subr.mxu0 0.0
        %1029 = vmatpush1.msra.mxu0 0.0
        %1030 = vmatprep.subr.mxu0 0.0
        %1031 = vmatpush1.msra.mxu0 0.0
        %1032 = vmatprep.subr.mxu0 0.0
        %1033 = vmatpush1.msra.mxu0 0.0
        %1034 = vmatprep.subr.mxu0 0.0
        %1035 = vmatpush1.msra.mxu0 0.0
        %1036 = vmatprep.subr.mxu0 0.0
        %1037 = vmatpush1.msra.mxu0 0.0
        %1038 = vmatprep.subr.mxu0 0.0
        %1039 = vmatpush1.msra.mxu0 0.0
        %1040 = vmatprep.subr.mxu0 0.0
        %1041 = vmatpush1.msra.mxu0 0.0
        %1042 = vmatprep.subr.mxu0 0.0
        %1043 = vmatpush1.msra.mxu0 0.0
        %1044 = vmatprep.subr.mxu0 0.0
        %1045 = vmatpush1.msra.mxu0 0.0
        %1046 = vmatprep.subr.mxu0 0.0
        %1047 = vmatpush1.msra.mxu0 0.0
        %1048 = vmatprep.subr.mxu0 0.0
        %1049 = vmatpush1.msra.mxu0 0.0
        %1050 = vmatprep.subr.mxu0 0.0
        %1051 = vmatpush1.msra.mxu0 0.0
        %1052 = vmatprep.subr.mxu0 0.0
        %1053 = vmatpush1.msra.mxu0 0.0
        %1054 = vmatprep.subr.mxu0 0.0
        %1055 = vmatpush1.msra.mxu0 0.0
        %1056 = vmatprep.subr.mxu0 0.0
        %1057 = vmatpush1.msra.mxu0 0.0
        %1058 = vmatprep.mubr.f32.mxu0 0.0
        %1059 = vmatmul.mubr.f32.gmra.mrb[0].mxu0 %v970
        %v1060 = vpop.f32.mrb[0].mxu0
        %v1061 = vadd.f32 0.0, %v1060
        %v1062 = vpop.f32.mrb[0].mxu0
        %1063 = vmatprep.mubr.f32.mxu0 0.0
        %1064 = vmatmul.mubr.f32.gmra.mrb[0].mxu0 %v971
        %v1065 = vpop.f32.mrb[0].mxu0
        %v1066 = vadd.f32 0.0, %v1065
        %v1067 = vpop.f32.mrb[0].mxu0
        %1068 = vmatprep.mubr.f32.mxu0 0.0
        %1069 = vmatmul.mubr.f32.gmra.mrb[0].mxu0 %v972
        %v1070 = vpop.f32.mrb[0].mxu0
        %v1071 = vadd.f32 0.0, %v1070
        %v1072 = vpop.f32.mrb[0].mxu0
        %1073 = vmatprep.mubr.f32.mxu0 0.0
        %1074 = vmatmul.mubr.f32.gmra.mrb[0].mxu0 %v973
        %v1075 = vpop.f32.mrb[0].mxu0
        %v1076 = vadd.f32 0.0, %v1075
        %v1077 = vpop.f32.mrb[0].mxu0
        %1078 = vmatprep.mubr.f32.mxu0 0.0
        %1079 = vmatmul.mubr.f32.gmra.mrb[0].mxu0 %v974
        %v1080 = vpop.f32.mrb[0].mxu0
        %v1081 = vadd.f32 0.0, %v1080
        %v1082 = vpop.f32.mrb[0].mxu0
        %1083 = vmatprep.mubr.f32.mxu0 0.0
        %1084 = vmatmul.mubr.f32.gmra.mrb[0].mxu0 %v975
        %v1085 = vpop.f32.mrb[0].mxu0
        %v1086 = vadd.f32 0.0, %v1085
        %v1087 = vpop.f32.mrb[0].mxu0
        %1088 = vmatprep.mubr.f32.mxu0 0.0
        %1089 = vmatmul.mubr.f32.gmra.mrb[0].mxu0 %v976
        %v1090 = vpop.f32.mrb[0].mxu0
        %v1091 = vadd.f32 0.0, %v1090
        %v1092 = vpop.f32.mrb[0].mxu0
        %1093 = vmatprep.mubr.f32.mxu0 0.0
        %1094 = vmatmul.mubr.f32.gmra.mrb[0].mxu0 %v977
        %v1095 = vpop.f32.mrb[0].mxu0
        %v1096 = vadd.f32 0.0, %v1095
        %v1097 = vpop.f32.mrb[0].mxu0
        %1098 = vdwg.mxu0
        %v1099 = vadd.f32 %v884, %v1061
        %v1100 = vadd.f32 %v889, %v1066
        %v1101 = vadd.f32 %v894, %v1071
        %v1102 = vadd.f32 %v899, %v1076
        %v1103 = vadd.f32 %v904, %v1081
        %v1104 = vadd.f32 %v909, %v1086
        %v1105 = vadd.f32 %v914, %v1091
        %v1106 = vadd.f32 %v919, %v1096
        %v1107 = vld [vmem:[#allocation2 + $0xf] sm:$0xff]
        %v1108 = vld [vmem:[#allocation2 + $0x17] sm:$0xff]
        %v1109 = vld [vmem:[#allocation2 + $0x1f] sm:$0xff]
        %v1110 = vld [vmem:[#allocation2 + $0x27] sm:$0xff]
        %v1111 = vld [vmem:[#allocation2 + $0x2f] sm:$0xff]
        %v1112 = vld [vmem:[#allocation2 + $0x37] sm:$0xff]
        %v1113 = vld [vmem:[#allocation2 + $0x3f] sm:$0xff]
        %v1114 = vld [vmem:[#allocation2 + $0x47] sm:$0xff]
        %v1115 = vmul.f32 %v1107, %v627
        %v1116 = vmul.f32 %v1108, %v632
        %v1117 = vmul.f32 %v1109, %v637
        %v1118 = vmul.f32 %v1110, %v642
        %v1119 = vmul.f32 %v1111, %v647
        %v1120 = vmul.f32 %v1112, %v652
        %v1121 = vmul.f32 %v1113, %v657
        %v1122 = vmul.f32 %v1114, %v662
        %v1123 = vld [vmem:[#allocation6 + $0x180] sm:$0xff]
        %v1124 = vld [vmem:[#allocation6 + $0x188] sm:$0xff]
        %v1125 = vld [vmem:[#allocation6 + $0x190] sm:$0xff]
        %v1126 = vld [vmem:[#allocation6 + $0x198] sm:$0xff]
        %v1127 = vld [vmem:[#allocation6 + $0x1a0] sm:$0xff]
        %v1128 = vld [vmem:[#allocation6 + $0x1a8] sm:$0xff]
        %v1129 = vld [vmem:[#allocation6 + $0x1b0] sm:$0xff]
        %v1130 = vld [vmem:[#allocation6 + $0x1b8] sm:$0xff]
        %v1131 = vld [vmem:[#allocation6 + $0x1c0] sm:$0xff]
        %v1132 = vld [vmem:[#allocation6 + $0x1c8] sm:$0xff]
        %v1133 = vld [vmem:[#allocation6 + $0x1d0] sm:$0xff]
        %v1134 = vld [vmem:[#allocation6 + $0x1d8] sm:$0xff]
        %v1135 = vld [vmem:[#allocation6 + $0x1e0] sm:$0xff]
        %v1136 = vld [vmem:[#allocation6 + $0x1e8] sm:$0xff]
        %v1137 = vld [vmem:[#allocation6 + $0x1f0] sm:$0xff]
        %v1138 = vld [vmem:[#allocation6 + $0x1f8] sm:$0xff]
        %1139 = vmatprep.subr.mxu0 0.0
        %1140 = vmatpush1.msra.mxu0 %v1123
        %1141 = vmatprep.subr.mxu0 0.0
        %1142 = vmatpush1.msra.mxu0 %v1124
        %1143 = vmatprep.subr.mxu0 0.0
        %1144 = vmatpush1.msra.mxu0 %v1125
        %1145 = vmatprep.subr.mxu0 0.0
        %1146 = vmatpush1.msra.mxu0 %v1126
        %1147 = vmatprep.subr.mxu0 0.0
        %1148 = vmatpush1.msra.mxu0 %v1127
        %1149 = vmatprep.subr.mxu0 0.0
        %1150 = vmatpush1.msra.mxu0 %v1128
        %1151 = vmatprep.subr.mxu0 0.0
        %1152 = vmatpush1.msra.mxu0 %v1129
        %1153 = vmatprep.subr.mxu0 0.0
        %1154 = vmatpush1.msra.mxu0 %v1130
        %1155 = vmatprep.subr.mxu0 0.0
        %1156 = vmatpush1.msra.mxu0 %v1131
        %1157 = vmatprep.subr.mxu0 0.0
        %1158 = vmatpush1.msra.mxu0 %v1132
        %1159 = vmatprep.subr.mxu0 0.0
        %1160 = vmatpush1.msra.mxu0 %v1133
        %1161 = vmatprep.subr.mxu0 0.0
        %1162 = vmatpush1.msra.mxu0 %v1134
        %1163 = vmatprep.subr.mxu0 0.0
        %1164 = vmatpush1.msra.mxu0 %v1135
        %1165 = vmatprep.subr.mxu0 0.0
        %1166 = vmatpush1.msra.mxu0 %v1136
        %1167 = vmatprep.subr.mxu0 0.0
        %1168 = vmatpush1.msra.mxu0 %v1137
        %1169 = vmatprep.subr.mxu0 0.0
        %1170 = vmatpush1.msra.mxu0 %v1138
        %1171 = vmatprep.subr.mxu0 0.0
        %1172 = vmatpush1.msra.mxu0 0.0
        %1173 = vmatprep.subr.mxu0 0.0
        %1174 = vmatpush1.msra.mxu0 0.0
        %1175 = vmatprep.subr.mxu0 0.0
        %1176 = vmatpush1.msra.mxu0 0.0
        %1177 = vmatprep.subr.mxu0 0.0
        %1178 = vmatpush1.msra.mxu0 0.0
        %1179 = vmatprep.subr.mxu0 0.0
        %1180 = vmatpush1.msra.mxu0 0.0
        %1181 = vmatprep.subr.mxu0 0.0
        %1182 = vmatpush1.msra.mxu0 0.0
        %1183 = vmatprep.subr.mxu0 0.0
        %1184 = vmatpush1.msra.mxu0 0.0
        %1185 = vmatprep.subr.mxu0 0.0
        %1186 = vmatpush1.msra.mxu0 0.0
        %1187 = vmatprep.subr.mxu0 0.0
        %1188 = vmatpush1.msra.mxu0 0.0
        %1189 = vmatprep.subr.mxu0 0.0
        %1190 = vmatpush1.msra.mxu0 0.0
        %1191 = vmatprep.subr.mxu0 0.0
        %1192 = vmatpush1.msra.mxu0 0.0
        %1193 = vmatprep.subr.mxu0 0.0
        %1194 = vmatpush1.msra.mxu0 0.0
        %1195 = vmatprep.subr.mxu0 0.0
        %1196 = vmatpush1.msra.mxu0 0.0
        %1197 = vmatprep.subr.mxu0 0.0
        %1198 = vmatpush1.msra.mxu0 0.0
        %1199 = vmatprep.subr.mxu0 0.0
        %1200 = vmatpush1.msra.mxu0 0.0
        %1201 = vmatprep.subr.mxu0 0.0
        %1202 = vmatpush1.msra.mxu0 0.0
        %1203 = vmatprep.mubr.f32.mxu0 0.0
        %1204 = vmatmul.mubr.f32.gmra.mrb[0].mxu0 %v1115
        %v1205 = vpop.f32.mrb[0].mxu0
        %v1206 = vadd.f32 0.0, %v1205
        %v1207 = vpop.f32.mrb[0].mxu0
        %1208 = vmatprep.mubr.f32.mxu0 0.0
        %1209 = vmatmul.mubr.f32.gmra.mrb[0].mxu0 %v1116
        %v1210 = vpop.f32.mrb[0].mxu0
        %v1211 = vadd.f32 0.0, %v1210
        %v1212 = vpop.f32.mrb[0].mxu0
        %1213 = vmatprep.mubr.f32.mxu0 0.0
        %1214 = vmatmul.mubr.f32.gmra.mrb[0].mxu0 %v1117
        %v1215 = vpop.f32.mrb[0].mxu0
        %v1216 = vadd.f32 0.0, %v1215
        %v1217 = vpop.f32.mrb[0].mxu0
        %1218 = vmatprep.mubr.f32.mxu0 0.0
        %1219 = vmatmul.mubr.f32.gmra.mrb[0].mxu0 %v1118
        %v1220 = vpop.f32.mrb[0].mxu0
        %v1221 = vadd.f32 0.0, %v1220
        %v1222 = vpop.f32.mrb[0].mxu0
        %1223 = vmatprep.mubr.f32.mxu0 0.0
        %1224 = vmatmul.mubr.f32.gmra.mrb[0].mxu0 %v1119
        %v1225 = vpop.f32.mrb[0].mxu0
        %v1226 = vadd.f32 0.0, %v1225
        %v1227 = vpop.f32.mrb[0].mxu0
        %1228 = vmatprep.mubr.f32.mxu0 0.0
        %1229 = vmatmul.mubr.f32.gmra.mrb[0].mxu0 %v1120
        %v1230 = vpop.f32.mrb[0].mxu0
        %v1231 = vadd.f32 0.0, %v1230
        %v1232 = vpop.f32.mrb[0].mxu0
        %1233 = vmatprep.mubr.f32.mxu0 0.0
        %1234 = vmatmul.mubr.f32.gmra.mrb[0].mxu0 %v1121
        %v1235 = vpop.f32.mrb[0].mxu0
        %v1236 = vadd.f32 0.0, %v1235
        %v1237 = vpop.f32.mrb[0].mxu0
        %1238 = vmatprep.mubr.f32.mxu0 0.0
        %1239 = vmatmul.mubr.f32.gmra.mrb[0].mxu0 %v1122
        %v1240 = vpop.f32.mrb[0].mxu0
        %v1241 = vadd.f32 0.0, %v1240
        %v1242 = vpop.f32.mrb[0].mxu0
        %1243 = vdwg.mxu0
        %v1244 = vadd.f32 %v1099, %v1206
        %v1245 = vadd.f32 %v1100, %v1211
        %v1246 = vadd.f32 %v1101, %v1216
        %v1247 = vadd.f32 %v1102, %v1221
        %v1248 = vadd.f32 %v1103, %v1226
        %v1249 = vadd.f32 %v1104, %v1231
        %v1250 = vadd.f32 %v1105, %v1236
        %v1251 = vadd.f32 %v1106, %v1241
        %v1252 = vld [vmem:[#allocation2 + $0x10] sm:$0xff]
        %v1253 = vld [vmem:[#allocation2 + $0x18] sm:$0xff]
        %v1254 = vld [vmem:[#allocation2 + $0x20] sm:$0xff]
        %v1255 = vld [vmem:[#allocation2 + $0x28] sm:$0xff]
        %v1256 = vld [vmem:[#allocation2 + $0x30] sm:$0xff]
        %v1257 = vld [vmem:[#allocation2 + $0x38] sm:$0xff]
        %v1258 = vld [vmem:[#allocation2 + $0x40] sm:$0xff]
        %v1259 = vld [vmem:[#allocation2 + $0x48] sm:$0xff]
        %v1260 = vld [vmem:[#allocation6 + $0x200] sm:$0xff]
        %v1261 = vld [vmem:[#allocation6 + $0x208] sm:$0xff]
        %v1262 = vld [vmem:[#allocation6 + $0x210] sm:$0xff]
        %v1263 = vld [vmem:[#allocation6 + $0x218] sm:$0xff]
        %v1264 = vld [vmem:[#allocation6 + $0x220] sm:$0xff]
        %v1265 = vld [vmem:[#allocation6 + $0x228] sm:$0xff]
        %v1266 = vld [vmem:[#allocation6 + $0x230] sm:$0xff]
        %v1267 = vld [vmem:[#allocation6 + $0x238] sm:$0xff]
        %v1268 = vld [vmem:[#allocation6 + $0x240] sm:$0xff]
        %v1269 = vld [vmem:[#allocation6 + $0x248] sm:$0xff]
        %v1270 = vld [vmem:[#allocation6 + $0x250] sm:$0xff]
        %v1271 = vld [vmem:[#allocation6 + $0x258] sm:$0xff]
        %v1272 = vld [vmem:[#allocation6 + $0x260] sm:$0xff]
        %v1273 = vld [vmem:[#allocation6 + $0x268] sm:$0xff]
        %v1274 = vld [vmem:[#allocation6 + $0x270] sm:$0xff]
        %v1275 = vld [vmem:[#allocation6 + $0x278] sm:$0xff]
        %1276 = vmatprep.subr.mxu0 0.0
        %1277 = vmatpush1.msra.mxu0 %v1260
        %1278 = vmatprep.subr.mxu0 0.0
        %1279 = vmatpush1.msra.mxu0 %v1261
        %1280 = vmatprep.subr.mxu0 0.0
        %1281 = vmatpush1.msra.mxu0 %v1262
        %1282 = vmatprep.subr.mxu0 0.0
        %1283 = vmatpush1.msra.mxu0 %v1263
        %1284 = vmatprep.subr.mxu0 0.0
        %1285 = vmatpush1.msra.mxu0 %v1264
        %1286 = vmatprep.subr.mxu0 0.0
        %1287 = vmatpush1.msra.mxu0 %v1265
        %1288 = vmatprep.subr.mxu0 0.0
        %1289 = vmatpush1.msra.mxu0 %v1266
        %1290 = vmatprep.subr.mxu0 0.0
        %1291 = vmatpush1.msra.mxu0 %v1267
        %1292 = vmatprep.subr.mxu0 0.0
        %1293 = vmatpush1.msra.mxu0 %v1268
        %1294 = vmatprep.subr.mxu0 0.0
        %1295 = vmatpush1.msra.mxu0 %v1269
        %1296 = vmatprep.subr.mxu0 0.0
        %1297 = vmatpush1.msra.mxu0 %v1270
        %1298 = vmatprep.subr.mxu0 0.0
        %1299 = vmatpush1.msra.mxu0 %v1271
        %1300 = vmatprep.subr.mxu0 0.0
        %1301 = vmatpush1.msra.mxu0 %v1272
        %1302 = vmatprep.subr.mxu0 0.0
        %1303 = vmatpush1.msra.mxu0 %v1273
        %1304 = vmatprep.subr.mxu0 0.0
        %1305 = vmatpush1.msra.mxu0 %v1274
        %1306 = vmatprep.subr.mxu0 0.0
        %1307 = vmatpush1.msra.mxu0 %v1275
        %1308 = vmatprep.subr.mxu0 0.0
        %1309 = vmatpush1.msra.mxu0 0.0
        %1310 = vmatprep.subr.mxu0 0.0
        %1311 = vmatpush1.msra.mxu0 0.0
        %1312 = vmatprep.subr.mxu0 0.0
        %1313 = vmatpush1.msra.mxu0 0.0
        %1314 = vmatprep.subr.mxu0 0.0
        %1315 = vmatpush1.msra.mxu0 0.0
        %1316 = vmatprep.subr.mxu0 0.0
        %1317 = vmatpush1.msra.mxu0 0.0
        %1318 = vmatprep.subr.mxu0 0.0
        %1319 = vmatpush1.msra.mxu0 0.0
        %1320 = vmatprep.subr.mxu0 0.0
        %1321 = vmatpush1.msra.mxu0 0.0
        %1322 = vmatprep.subr.mxu0 0.0
        %1323 = vmatpush1.msra.mxu0 0.0
        %1324 = vmatprep.subr.mxu0 0.0
        %1325 = vmatpush1.msra.mxu0 0.0
        %1326 = vmatprep.subr.mxu0 0.0
        %1327 = vmatpush1.msra.mxu0 0.0
        %1328 = vmatprep.subr.mxu0 0.0
        %1329 = vmatpush1.msra.mxu0 0.0
        %1330 = vmatprep.subr.mxu0 0.0
        %1331 = vmatpush1.msra.mxu0 0.0
        %1332 = vmatprep.subr.mxu0 0.0
        %1333 = vmatpush1.msra.mxu0 0.0
        %1334 = vmatprep.subr.mxu0 0.0
        %1335 = vmatpush1.msra.mxu0 0.0
        %1336 = vmatprep.subr.mxu0 0.0
        %1337 = vmatpush1.msra.mxu0 0.0
        %1338 = vmatprep.subr.mxu0 0.0
        %1339 = vmatpush1.msra.mxu0 0.0
        %1340 = vmatprep.mubr.f32.mxu0 0.0
        %1341 = vmatmul.mubr.f32.gmra.mrb[0].mxu0 %v1252
        %v1342 = vpop.f32.mrb[0].mxu0
        %v1343 = vadd.f32 0.0, %v1342
        %v1344 = vpop.f32.mrb[0].mxu0
        %1345 = vmatprep.mubr.f32.mxu0 0.0
        %1346 = vmatmul.mubr.f32.gmra.mrb[0].mxu0 %v1253
        %v1347 = vpop.f32.mrb[0].mxu0
        %v1348 = vadd.f32 0.0, %v1347
        %v1349 = vpop.f32.mrb[0].mxu0
        %1350 = vmatprep.mubr.f32.mxu0 0.0
        %1351 = vmatmul.mubr.f32.gmra.mrb[0].mxu0 %v1254
        %v1352 = vpop.f32.mrb[0].mxu0
        %v1353 = vadd.f32 0.0, %v1352
        %v1354 = vpop.f32.mrb[0].mxu0
        %1355 = vmatprep.mubr.f32.mxu0 0.0
        %1356 = vmatmul.mubr.f32.gmra.mrb[0].mxu0 %v1255
        %v1357 = vpop.f32.mrb[0].mxu0
        %v1358 = vadd.f32 0.0, %v1357
        %v1359 = vpop.f32.mrb[0].mxu0
        %1360 = vmatprep.mubr.f32.mxu0 0.0
        %1361 = vmatmul.mubr.f32.gmra.mrb[0].mxu0 %v1256
        %v1362 = vpop.f32.mrb[0].mxu0
        %v1363 = vadd.f32 0.0, %v1362
        %v1364 = vpop.f32.mrb[0].mxu0
        %1365 = vmatprep.mubr.f32.mxu0 0.0
        %1366 = vmatmul.mubr.f32.gmra.mrb[0].mxu0 %v1257
        %v1367 = vpop.f32.mrb[0].mxu0
        %v1368 = vadd.f32 0.0, %v1367
        %v1369 = vpop.f32.mrb[0].mxu0
        %1370 = vmatprep.mubr.f32.mxu0 0.0
        %1371 = vmatmul.mubr.f32.gmra.mrb[0].mxu0 %v1258
        %v1372 = vpop.f32.mrb[0].mxu0
        %v1373 = vadd.f32 0.0, %v1372
        %v1374 = vpop.f32.mrb[0].mxu0
        %1375 = vmatprep.mubr.f32.mxu0 0.0
        %1376 = vmatmul.mubr.f32.gmra.mrb[0].mxu0 %v1259
        %v1377 = vpop.f32.mrb[0].mxu0
        %v1378 = vadd.f32 0.0, %v1377
        %v1379 = vpop.f32.mrb[0].mxu0
        %1380 = vdwg.mxu0
        %v1381 = vadd.f32 %v1244, %v1343
        %v1382 = vadd.f32 %v1245, %v1348
        %v1383 = vadd.f32 %v1246, %v1353
        %v1384 = vadd.f32 %v1247, %v1358
        %v1385 = vadd.f32 %v1248, %v1363
        %v1386 = vadd.f32 %v1249, %v1368
        %v1387 = vadd.f32 %v1250, %v1373
        %v1388 = vadd.f32 %v1251, %v1378
        %v1389 = vld [vmem:[#allocation2 + $0x11] sm:$0xff]
        %v1390 = vld [vmem:[#allocation2 + $0x19] sm:$0xff]
        %v1391 = vld [vmem:[#allocation2 + $0x21] sm:$0xff]
        %v1392 = vld [vmem:[#allocation2 + $0x29] sm:$0xff]
        %v1393 = vld [vmem:[#allocation2 + $0x31] sm:$0xff]
        %v1394 = vld [vmem:[#allocation2 + $0x39] sm:$0xff]
        %v1395 = vld [vmem:[#allocation2 + $0x41] sm:$0xff]
        %v1396 = vld [vmem:[#allocation2 + $0x49] sm:$0xff]
        %v1397 = vmul.f32 %v1389, %v933
        %v1398 = vmul.f32 %v1390, %v938
        %v1399 = vmul.f32 %v1391, %v943
        %v1400 = vmul.f32 %v1392, %v948
        %v1401 = vmul.f32 %v1393, %v953
        %v1402 = vmul.f32 %v1394, %v958
        %v1403 = vmul.f32 %v1395, %v963
        %v1404 = vmul.f32 %v1396, %v968
        %v1405 = vld [vmem:[#allocation6 + $0x280] sm:$0xff]
        %v1406 = vld [vmem:[#allocation6 + $0x288] sm:$0xff]
        %v1407 = vld [vmem:[#allocation6 + $0x290] sm:$0xff]
        %v1408 = vld [vmem:[#allocation6 + $0x298] sm:$0xff]
        %v1409 = vld [vmem:[#allocation6 + $0x2a0] sm:$0xff]
        %v1410 = vld [vmem:[#allocation6 + $0x2a8] sm:$0xff]
        %v1411 = vld [vmem:[#allocation6 + $0x2b0] sm:$0xff]
        %v1412 = vld [vmem:[#allocation6 + $0x2b8] sm:$0xff]
        %v1413 = vld [vmem:[#allocation6 + $0x2c0] sm:$0xff]
        %v1414 = vld [vmem:[#allocation6 + $0x2c8] sm:$0xff]
        %v1415 = vld [vmem:[#allocation6 + $0x2d0] sm:$0xff]
        %v1416 = vld [vmem:[#allocation6 + $0x2d8] sm:$0xff]
        %v1417 = vld [vmem:[#allocation6 + $0x2e0] sm:$0xff]
        %v1418 = vld [vmem:[#allocation6 + $0x2e8] sm:$0xff]
        %v1419 = vld [vmem:[#allocation6 + $0x2f0] sm:$0xff]
        %v1420 = vld [vmem:[#allocation6 + $0x2f8] sm:$0xff]
        %1421 = vmatprep.subr.mxu0 0.0
        %1422 = vmatpush1.msra.mxu0 %v1405
        %1423 = vmatprep.subr.mxu0 0.0
        %1424 = vmatpush1.msra.mxu0 %v1406
        %1425 = vmatprep.subr.mxu0 0.0
        %1426 = vmatpush1.msra.mxu0 %v1407
        %1427 = vmatprep.subr.mxu0 0.0
        %1428 = vmatpush1.msra.mxu0 %v1408
        %1429 = vmatprep.subr.mxu0 0.0
        %1430 = vmatpush1.msra.mxu0 %v1409
        %1431 = vmatprep.subr.mxu0 0.0
        %1432 = vmatpush1.msra.mxu0 %v1410
        %1433 = vmatprep.subr.mxu0 0.0
        %1434 = vmatpush1.msra.mxu0 %v1411
        %1435 = vmatprep.subr.mxu0 0.0
        %1436 = vmatpush1.msra.mxu0 %v1412
        %1437 = vmatprep.subr.mxu0 0.0
        %1438 = vmatpush1.msra.mxu0 %v1413
        %1439 = vmatprep.subr.mxu0 0.0
        %1440 = vmatpush1.msra.mxu0 %v1414
        %1441 = vmatprep.subr.mxu0 0.0
        %1442 = vmatpush1.msra.mxu0 %v1415
        %1443 = vmatprep.subr.mxu0 0.0
        %1444 = vmatpush1.msra.mxu0 %v1416
        %1445 = vmatprep.subr.mxu0 0.0
        %1446 = vmatpush1.msra.mxu0 %v1417
        %1447 = vmatprep.subr.mxu0 0.0
        %1448 = vmatpush1.msra.mxu0 %v1418
        %1449 = vmatprep.subr.mxu0 0.0
        %1450 = vmatpush1.msra.mxu0 %v1419
        %1451 = vmatprep.subr.mxu0 0.0
        %1452 = vmatpush1.msra.mxu0 %v1420
        %1453 = vmatprep.subr.mxu0 0.0
        %1454 = vmatpush1.msra.mxu0 0.0
        %1455 = vmatprep.subr.mxu0 0.0
        %1456 = vmatpush1.msra.mxu0 0.0
        %1457 = vmatprep.subr.mxu0 0.0
        %1458 = vmatpush1.msra.mxu0 0.0
        %1459 = vmatprep.subr.mxu0 0.0
        %1460 = vmatpush1.msra.mxu0 0.0
        %1461 = vmatprep.subr.mxu0 0.0
        %1462 = vmatpush1.msra.mxu0 0.0
        %1463 = vmatprep.subr.mxu0 0.0
        %1464 = vmatpush1.msra.mxu0 0.0
        %1465 = vmatprep.subr.mxu0 0.0
        %1466 = vmatpush1.msra.mxu0 0.0
        %1467 = vmatprep.subr.mxu0 0.0
        %1468 = vmatpush1.msra.mxu0 0.0
        %1469 = vmatprep.subr.mxu0 0.0
        %1470 = vmatpush1.msra.mxu0 0.0
        %1471 = vmatprep.subr.mxu0 0.0
        %1472 = vmatpush1.msra.mxu0 0.0
        %1473 = vmatprep.subr.mxu0 0.0
        %1474 = vmatpush1.msra.mxu0 0.0
        %1475 = vmatprep.subr.mxu0 0.0
        %1476 = vmatpush1.msra.mxu0 0.0
        %1477 = vmatprep.subr.mxu0 0.0
        %1478 = vmatpush1.msra.mxu0 0.0
        %1479 = vmatprep.subr.mxu0 0.0
        %1480 = vmatpush1.msra.mxu0 0.0
        %1481 = vmatprep.subr.mxu0 0.0
        %1482 = vmatpush1.msra.mxu0 0.0
        %1483 = vmatprep.subr.mxu0 0.0
        %1484 = vmatpush1.msra.mxu0 0.0
        %1485 = vmatprep.mubr.f32.mxu0 0.0
        %1486 = vmatmul.mubr.f32.gmra.mrb[0].mxu0 %v1397
        %v1487 = vpop.f32.mrb[0].mxu0
        %v1488 = vadd.f32 0.0, %v1487
        %v1489 = vpop.f32.mrb[0].mxu0
        %1490 = vmatprep.mubr.f32.mxu0 0.0
        %1491 = vmatmul.mubr.f32.gmra.mrb[0].mxu0 %v1398
        %v1492 = vpop.f32.mrb[0].mxu0
        %v1493 = vadd.f32 0.0, %v1492
        %v1494 = vpop.f32.mrb[0].mxu0
        %1495 = vmatprep.mubr.f32.mxu0 0.0
        %1496 = vmatmul.mubr.f32.gmra.mrb[0].mxu0 %v1399
        %v1497 = vpop.f32.mrb[0].mxu0
        %v1498 = vadd.f32 0.0, %v1497
        %v1499 = vpop.f32.mrb[0].mxu0
        %1500 = vmatprep.mubr.f32.mxu0 0.0
        %1501 = vmatmul.mubr.f32.gmra.mrb[0].mxu0 %v1400
        %v1502 = vpop.f32.mrb[0].mxu0
        %v1503 = vadd.f32 0.0, %v1502
        %v1504 = vpop.f32.mrb[0].mxu0
        %1505 = vmatprep.mubr.f32.mxu0 0.0
        %1506 = vmatmul.mubr.f32.gmra.mrb[0].mxu0 %v1401
        %v1507 = vpop.f32.mrb[0].mxu0
        %v1508 = vadd.f32 0.0, %v1507
        %v1509 = vpop.f32.mrb[0].mxu0
        %1510 = vmatprep.mubr.f32.mxu0 0.0
        %1511 = vmatmul.mubr.f32.gmra.mrb[0].mxu0 %v1402
        %v1512 = vpop.f32.mrb[0].mxu0
        %v1513 = vadd.f32 0.0, %v1512
        %v1514 = vpop.f32.mrb[0].mxu0
        %1515 = vmatprep.mubr.f32.mxu0 0.0
        %1516 = vmatmul.mubr.f32.gmra.mrb[0].mxu0 %v1403
        %v1517 = vpop.f32.mrb[0].mxu0
        %v1518 = vadd.f32 0.0, %v1517
        %v1519 = vpop.f32.mrb[0].mxu0
        %1520 = vmatprep.mubr.f32.mxu0 0.0
        %1521 = vmatmul.mubr.f32.gmra.mrb[0].mxu0 %v1404
        %v1522 = vpop.f32.mrb[0].mxu0
        %v1523 = vadd.f32 0.0, %v1522
        %v1524 = vpop.f32.mrb[0].mxu0
        %1525 = vdwg.mxu0
        %v1526 = vadd.f32 %v1381, %v1488
        %v1527 = vadd.f32 %v1382, %v1493
        %v1528 = vadd.f32 %v1383, %v1498
        %v1529 = vadd.f32 %v1384, %v1503
        %v1530 = vadd.f32 %v1385, %v1508
        %v1531 = vadd.f32 %v1386, %v1513
        %v1532 = vadd.f32 %v1387, %v1518
        %v1533 = vadd.f32 %v1388, %v1523
        %v1534 = vld [vmem:[#allocation2 + $0x17] sm:$0xff]
        %v1535 = vld [vmem:[#allocation2 + $0x1f] sm:$0xff]
        %v1536 = vld [vmem:[#allocation2 + $0x27] sm:$0xff]
        %v1537 = vld [vmem:[#allocation2 + $0x2f] sm:$0xff]
        %v1538 = vld [vmem:[#allocation2 + $0x37] sm:$0xff]
        %v1539 = vld [vmem:[#allocation2 + $0x3f] sm:$0xff]
        %v1540 = vld [vmem:[#allocation2 + $0x47] sm:$0xff]
        %v1541 = vld [vmem:[#allocation2 + $0x4f] sm:$0xff]
        %v1542 = vmul.f32 %v1534, %v627
        %v1543 = vmul.f32 %v1535, %v632
        %v1544 = vmul.f32 %v1536, %v637
        %v1545 = vmul.f32 %v1537, %v642
        %v1546 = vmul.f32 %v1538, %v647
        %v1547 = vmul.f32 %v1539, %v652
        %v1548 = vmul.f32 %v1540, %v657
        %v1549 = vmul.f32 %v1541, %v662
        %v1550 = vld [vmem:[#allocation6 + $0x300] sm:$0xff]
        %v1551 = vld [vmem:[#allocation6 + $0x308] sm:$0xff]
        %v1552 = vld [vmem:[#allocation6 + $0x310] sm:$0xff]
        %v1553 = vld [vmem:[#allocation6 + $0x318] sm:$0xff]
        %v1554 = vld [vmem:[#allocation6 + $0x320] sm:$0xff]
        %v1555 = vld [vmem:[#allocation6 + $0x328] sm:$0xff]
        %v1556 = vld [vmem:[#allocation6 + $0x330] sm:$0xff]
        %v1557 = vld [vmem:[#allocation6 + $0x338] sm:$0xff]
        %v1558 = vld [vmem:[#allocation6 + $0x340] sm:$0xff]
        %v1559 = vld [vmem:[#allocation6 + $0x348] sm:$0xff]
        %v1560 = vld [vmem:[#allocation6 + $0x350] sm:$0xff]
        %v1561 = vld [vmem:[#allocation6 + $0x358] sm:$0xff]
        %v1562 = vld [vmem:[#allocation6 + $0x360] sm:$0xff]
        %v1563 = vld [vmem:[#allocation6 + $0x368] sm:$0xff]
        %v1564 = vld [vmem:[#allocation6 + $0x370] sm:$0xff]
        %v1565 = vld [vmem:[#allocation6 + $0x378] sm:$0xff]
        %1566 = vmatprep.subr.mxu0 0.0
        %1567 = vmatpush1.msra.mxu0 %v1550
        %1568 = vmatprep.subr.mxu0 0.0
        %1569 = vmatpush1.msra.mxu0 %v1551
        %1570 = vmatprep.subr.mxu0 0.0
        %1571 = vmatpush1.msra.mxu0 %v1552
        %1572 = vmatprep.subr.mxu0 0.0
        %1573 = vmatpush1.msra.mxu0 %v1553
        %1574 = vmatprep.subr.mxu0 0.0
        %1575 = vmatpush1.msra.mxu0 %v1554
        %1576 = vmatprep.subr.mxu0 0.0
        %1577 = vmatpush1.msra.mxu0 %v1555
        %1578 = vmatprep.subr.mxu0 0.0
        %1579 = vmatpush1.msra.mxu0 %v1556
        %1580 = vmatprep.subr.mxu0 0.0
        %1581 = vmatpush1.msra.mxu0 %v1557
        %1582 = vmatprep.subr.mxu0 0.0
        %1583 = vmatpush1.msra.mxu0 %v1558
        %1584 = vmatprep.subr.mxu0 0.0
        %1585 = vmatpush1.msra.mxu0 %v1559
        %1586 = vmatprep.subr.mxu0 0.0
        %1587 = vmatpush1.msra.mxu0 %v1560
        %1588 = vmatprep.subr.mxu0 0.0
        %1589 = vmatpush1.msra.mxu0 %v1561
        %1590 = vmatprep.subr.mxu0 0.0
        %1591 = vmatpush1.msra.mxu0 %v1562
        %1592 = vmatprep.subr.mxu0 0.0
        %1593 = vmatpush1.msra.mxu0 %v1563
        %1594 = vmatprep.subr.mxu0 0.0
        %1595 = vmatpush1.msra.mxu0 %v1564
        %1596 = vmatprep.subr.mxu0 0.0
        %1597 = vmatpush1.msra.mxu0 %v1565
        %1598 = vmatprep.subr.mxu0 0.0
        %1599 = vmatpush1.msra.mxu0 0.0
        %1600 = vmatprep.subr.mxu0 0.0
        %1601 = vmatpush1.msra.mxu0 0.0
        %1602 = vmatprep.subr.mxu0 0.0
        %1603 = vmatpush1.msra.mxu0 0.0
        %1604 = vmatprep.subr.mxu0 0.0
        %1605 = vmatpush1.msra.mxu0 0.0
        %1606 = vmatprep.subr.mxu0 0.0
        %1607 = vmatpush1.msra.mxu0 0.0
        %1608 = vmatprep.subr.mxu0 0.0
        %1609 = vmatpush1.msra.mxu0 0.0
        %1610 = vmatprep.subr.mxu0 0.0
        %1611 = vmatpush1.msra.mxu0 0.0
        %1612 = vmatprep.subr.mxu0 0.0
        %1613 = vmatpush1.msra.mxu0 0.0
        %1614 = vmatprep.subr.mxu0 0.0
        %1615 = vmatpush1.msra.mxu0 0.0
        %1616 = vmatprep.subr.mxu0 0.0
        %1617 = vmatpush1.msra.mxu0 0.0
        %1618 = vmatprep.subr.mxu0 0.0
        %1619 = vmatpush1.msra.mxu0 0.0
        %1620 = vmatprep.subr.mxu0 0.0
        %1621 = vmatpush1.msra.mxu0 0.0
        %1622 = vmatprep.subr.mxu0 0.0
        %1623 = vmatpush1.msra.mxu0 0.0
        %1624 = vmatprep.subr.mxu0 0.0
        %1625 = vmatpush1.msra.mxu0 0.0
        %1626 = vmatprep.subr.mxu0 0.0
        %1627 = vmatpush1.msra.mxu0 0.0
        %1628 = vmatprep.subr.mxu0 0.0
        %1629 = vmatpush1.msra.mxu0 0.0
        %1630 = vmatprep.mubr.f32.mxu0 0.0
        %1631 = vmatmul.mubr.f32.gmra.mrb[0].mxu0 %v1542
        %v1632 = vpop.f32.mrb[0].mxu0
        %v1633 = vadd.f32 0.0, %v1632
        %v1634 = vpop.f32.mrb[0].mxu0
        %1635 = vmatprep.mubr.f32.mxu0 0.0
        %1636 = vmatmul.mubr.f32.gmra.mrb[0].mxu0 %v1543
        %v1637 = vpop.f32.mrb[0].mxu0
        %v1638 = vadd.f32 0.0, %v1637
        %v1639 = vpop.f32.mrb[0].mxu0
        %1640 = vmatprep.mubr.f32.mxu0 0.0
        %1641 = vmatmul.mubr.f32.gmra.mrb[0].mxu0 %v1544
        %v1642 = vpop.f32.mrb[0].mxu0
        %v1643 = vadd.f32 0.0, %v1642
        %v1644 = vpop.f32.mrb[0].mxu0
        %1645 = vmatprep.mubr.f32.mxu0 0.0
        %1646 = vmatmul.mubr.f32.gmra.mrb[0].mxu0 %v1545
        %v1647 = vpop.f32.mrb[0].mxu0
        %v1648 = vadd.f32 0.0, %v1647
        %v1649 = vpop.f32.mrb[0].mxu0
        %1650 = vmatprep.mubr.f32.mxu0 0.0
        %1651 = vmatmul.mubr.f32.gmra.mrb[0].mxu0 %v1546
        %v1652 = vpop.f32.mrb[0].mxu0
        %v1653 = vadd.f32 0.0, %v1652
        %v1654 = vpop.f32.mrb[0].mxu0
        %1655 = vmatprep.mubr.f32.mxu0 0.0
        %1656 = vmatmul.mubr.f32.gmra.mrb[0].mxu0 %v1547
        %v1657 = vpop.f32.mrb[0].mxu0
        %v1658 = vadd.f32 0.0, %v1657
        %v1659 = vpop.f32.mrb[0].mxu0
        %1660 = vmatprep.mubr.f32.mxu0 0.0
        %1661 = vmatmul.mubr.f32.gmra.mrb[0].mxu0 %v1548
        %v1662 = vpop.f32.mrb[0].mxu0
        %v1663 = vadd.f32 0.0, %v1662
        %v1664 = vpop.f32.mrb[0].mxu0
        %1665 = vmatprep.mubr.f32.mxu0 0.0
        %1666 = vmatmul.mubr.f32.gmra.mrb[0].mxu0 %v1549
        %v1667 = vpop.f32.mrb[0].mxu0
        %v1668 = vadd.f32 0.0, %v1667
        %v1669 = vpop.f32.mrb[0].mxu0
        %1670 = vdwg.mxu0
        %v1671 = vadd.f32 %v1526, %v1633
        %v1672 = vadd.f32 %v1527, %v1638
        %v1673 = vadd.f32 %v1528, %v1643
        %v1674 = vadd.f32 %v1529, %v1648
        %v1675 = vadd.f32 %v1530, %v1653
        %v1676 = vadd.f32 %v1531, %v1658
        %v1677 = vadd.f32 %v1532, %v1663
        %v1678 = vadd.f32 %v1533, %v1668
        %v1679 = vld [vmem:[#allocation2 + $0x18] sm:$0xff]
        %v1680 = vld [vmem:[#allocation2 + $0x20] sm:$0xff]
        %v1681 = vld [vmem:[#allocation2 + $0x28] sm:$0xff]
        %v1682 = vld [vmem:[#allocation2 + $0x30] sm:$0xff]
        %v1683 = vld [vmem:[#allocation2 + $0x38] sm:$0xff]
        %v1684 = vld [vmem:[#allocation2 + $0x40] sm:$0xff]
        %v1685 = vld [vmem:[#allocation2 + $0x48] sm:$0xff]
        %v1686 = vld [vmem:[#allocation2 + $0x50] sm:$0xff]
        %v1687 = vld [vmem:[#allocation6 + $0x380] sm:$0xff]
        %v1688 = vld [vmem:[#allocation6 + $0x388] sm:$0xff]
        %v1689 = vld [vmem:[#allocation6 + $0x390] sm:$0xff]
        %v1690 = vld [vmem:[#allocation6 + $0x398] sm:$0xff]
        %v1691 = vld [vmem:[#allocation6 + $0x3a0] sm:$0xff]
        %v1692 = vld [vmem:[#allocation6 + $0x3a8] sm:$0xff]
        %v1693 = vld [vmem:[#allocation6 + $0x3b0] sm:$0xff]
        %v1694 = vld [vmem:[#allocation6 + $0x3b8] sm:$0xff]
        %v1695 = vld [vmem:[#allocation6 + $0x3c0] sm:$0xff]
        %v1696 = vld [vmem:[#allocation6 + $0x3c8] sm:$0xff]
        %v1697 = vld [vmem:[#allocation6 + $0x3d0] sm:$0xff]
        %v1698 = vld [vmem:[#allocation6 + $0x3d8] sm:$0xff]
        %v1699 = vld [vmem:[#allocation6 + $0x3e0] sm:$0xff]
        %v1700 = vld [vmem:[#allocation6 + $0x3e8] sm:$0xff]
        %v1701 = vld [vmem:[#allocation6 + $0x3f0] sm:$0xff]
        %v1702 = vld [vmem:[#allocation6 + $0x3f8] sm:$0xff]
        %1703 = vmatprep.subr.mxu0 0.0
        %1704 = vmatpush1.msra.mxu0 %v1687
        %1705 = vmatprep.subr.mxu0 0.0
        %1706 = vmatpush1.msra.mxu0 %v1688
        %1707 = vmatprep.subr.mxu0 0.0
        %1708 = vmatpush1.msra.mxu0 %v1689
        %1709 = vmatprep.subr.mxu0 0.0
        %1710 = vmatpush1.msra.mxu0 %v1690
        %1711 = vmatprep.subr.mxu0 0.0
        %1712 = vmatpush1.msra.mxu0 %v1691
        %1713 = vmatprep.subr.mxu0 0.0
        %1714 = vmatpush1.msra.mxu0 %v1692
        %1715 = vmatprep.subr.mxu0 0.0
        %1716 = vmatpush1.msra.mxu0 %v1693
        %1717 = vmatprep.subr.mxu0 0.0
        %1718 = vmatpush1.msra.mxu0 %v1694
        %1719 = vmatprep.subr.mxu0 0.0
        %1720 = vmatpush1.msra.mxu0 %v1695
        %1721 = vmatprep.subr.mxu0 0.0
        %1722 = vmatpush1.msra.mxu0 %v1696
        %1723 = vmatprep.subr.mxu0 0.0
        %1724 = vmatpush1.msra.mxu0 %v1697
        %1725 = vmatprep.subr.mxu0 0.0
        %1726 = vmatpush1.msra.mxu0 %v1698
        %1727 = vmatprep.subr.mxu0 0.0
        %1728 = vmatpush1.msra.mxu0 %v1699
        %1729 = vmatprep.subr.mxu0 0.0
        %1730 = vmatpush1.msra.mxu0 %v1700
        %1731 = vmatprep.subr.mxu0 0.0
        %1732 = vmatpush1.msra.mxu0 %v1701
        %1733 = vmatprep.subr.mxu0 0.0
        %1734 = vmatpush1.msra.mxu0 %v1702
        %1735 = vmatprep.subr.mxu0 0.0
        %1736 = vmatpush1.msra.mxu0 0.0
        %1737 = vmatprep.subr.mxu0 0.0
        %1738 = vmatpush1.msra.mxu0 0.0
        %1739 = vmatprep.subr.mxu0 0.0
        %1740 = vmatpush1.msra.mxu0 0.0
        %1741 = vmatprep.subr.mxu0 0.0
        %1742 = vmatpush1.msra.mxu0 0.0
        %1743 = vmatprep.subr.mxu0 0.0
        %1744 = vmatpush1.msra.mxu0 0.0
        %1745 = vmatprep.subr.mxu0 0.0
        %1746 = vmatpush1.msra.mxu0 0.0
        %1747 = vmatprep.subr.mxu0 0.0
        %1748 = vmatpush1.msra.mxu0 0.0
        %1749 = vmatprep.subr.mxu0 0.0
        %1750 = vmatpush1.msra.mxu0 0.0
        %1751 = vmatprep.subr.mxu0 0.0
        %1752 = vmatpush1.msra.mxu0 0.0
        %1753 = vmatprep.subr.mxu0 0.0
        %1754 = vmatpush1.msra.mxu0 0.0
        %1755 = vmatprep.subr.mxu0 0.0
        %1756 = vmatpush1.msra.mxu0 0.0
        %1757 = vmatprep.subr.mxu0 0.0
        %1758 = vmatpush1.msra.mxu0 0.0
        %1759 = vmatprep.subr.mxu0 0.0
        %1760 = vmatpush1.msra.mxu0 0.0
        %1761 = vmatprep.subr.mxu0 0.0
        %1762 = vmatpush1.msra.mxu0 0.0
        %1763 = vmatprep.subr.mxu0 0.0
        %1764 = vmatpush1.msra.mxu0 0.0
        %1765 = vmatprep.subr.mxu0 0.0
        %1766 = vmatpush1.msra.mxu0 0.0
        %1767 = vmatprep.mubr.f32.mxu0 0.0
        %1768 = vmatmul.mubr.f32.gmra.mrb[0].mxu0 %v1679
        %v1769 = vpop.f32.mrb[0].mxu0
        %v1770 = vadd.f32 0.0, %v1769
        %v1771 = vpop.f32.mrb[0].mxu0
        %1772 = vmatprep.mubr.f32.mxu0 0.0
        %1773 = vmatmul.mubr.f32.gmra.mrb[0].mxu0 %v1680
        %v1774 = vpop.f32.mrb[0].mxu0
        %v1775 = vadd.f32 0.0, %v1774
        %v1776 = vpop.f32.mrb[0].mxu0
        %1777 = vmatprep.mubr.f32.mxu0 0.0
        %1778 = vmatmul.mubr.f32.gmra.mrb[0].mxu0 %v1681
        %v1779 = vpop.f32.mrb[0].mxu0
        %v1780 = vadd.f32 0.0, %v1779
        %v1781 = vpop.f32.mrb[0].mxu0
        %1782 = vmatprep.mubr.f32.mxu0 0.0
        %1783 = vmatmul.mubr.f32.gmra.mrb[0].mxu0 %v1682
        %v1784 = vpop.f32.mrb[0].mxu0
        %v1785 = vadd.f32 0.0, %v1784
        %v1786 = vpop.f32.mrb[0].mxu0
        %1787 = vmatprep.mubr.f32.mxu0 0.0
        %1788 = vmatmul.mubr.f32.gmra.mrb[0].mxu0 %v1683
        %v1789 = vpop.f32.mrb[0].mxu0
        %v1790 = vadd.f32 0.0, %v1789
        %v1791 = vpop.f32.mrb[0].mxu0
        %1792 = vmatprep.mubr.f32.mxu0 0.0
        %1793 = vmatmul.mubr.f32.gmra.mrb[0].mxu0 %v1684
        %v1794 = vpop.f32.mrb[0].mxu0
        %v1795 = vadd.f32 0.0, %v1794
        %v1796 = vpop.f32.mrb[0].mxu0
        %1797 = vmatprep.mubr.f32.mxu0 0.0
        %1798 = vmatmul.mubr.f32.gmra.mrb[0].mxu0 %v1685
        %v1799 = vpop.f32.mrb[0].mxu0
        %v1800 = vadd.f32 0.0, %v1799
        %v1801 = vpop.f32.mrb[0].mxu0
        %1802 = vmatprep.mubr.f32.mxu0 0.0
        %1803 = vmatmul.mubr.f32.gmra.mrb[0].mxu0 %v1686
        %v1804 = vpop.f32.mrb[0].mxu0
        %v1805 = vadd.f32 0.0, %v1804
        %v1806 = vpop.f32.mrb[0].mxu0
        %1807 = vdwg.mxu0
        %v1808 = vadd.f32 %v1671, %v1770
        %v1809 = vadd.f32 %v1672, %v1775
        %v1810 = vadd.f32 %v1673, %v1780
        %v1811 = vadd.f32 %v1674, %v1785
        %v1812 = vadd.f32 %v1675, %v1790
        %v1813 = vadd.f32 %v1676, %v1795
        %v1814 = vadd.f32 %v1677, %v1800
        %v1815 = vadd.f32 %v1678, %v1805
        %v1816 = vld [vmem:[#allocation2 + $0x19] sm:$0xff]
        %v1817 = vld [vmem:[#allocation2 + $0x21] sm:$0xff]
        %v1818 = vld [vmem:[#allocation2 + $0x29] sm:$0xff]
        %v1819 = vld [vmem:[#allocation2 + $0x31] sm:$0xff]
        %v1820 = vld [vmem:[#allocation2 + $0x39] sm:$0xff]
        %v1821 = vld [vmem:[#allocation2 + $0x41] sm:$0xff]
        %v1822 = vld [vmem:[#allocation2 + $0x49] sm:$0xff]
        %v1823 = vld [vmem:[#allocation2 + $0x51] sm:$0xff]
        %v1824 = vmul.f32 %v1816, %v933
        %v1825 = vmul.f32 %v1817, %v938
        %v1826 = vmul.f32 %v1818, %v943
        %v1827 = vmul.f32 %v1819, %v948
        %v1828 = vmul.f32 %v1820, %v953
        %v1829 = vmul.f32 %v1821, %v958
        %v1830 = vmul.f32 %v1822, %v963
        %v1831 = vmul.f32 %v1823, %v968
        %v1832 = vld [vmem:[#allocation6 + $0x400] sm:$0xff]
        %v1833 = vld [vmem:[#allocation6 + $0x408] sm:$0xff]
        %v1834 = vld [vmem:[#allocation6 + $0x410] sm:$0xff]
        %v1835 = vld [vmem:[#allocation6 + $0x418] sm:$0xff]
        %v1836 = vld [vmem:[#allocation6 + $0x420] sm:$0xff]
        %v1837 = vld [vmem:[#allocation6 + $0x428] sm:$0xff]
        %v1838 = vld [vmem:[#allocation6 + $0x430] sm:$0xff]
        %v1839 = vld [vmem:[#allocation6 + $0x438] sm:$0xff]
        %v1840 = vld [vmem:[#allocation6 + $0x440] sm:$0xff]
        %v1841 = vld [vmem:[#allocation6 + $0x448] sm:$0xff]
        %v1842 = vld [vmem:[#allocation6 + $0x450] sm:$0xff]
        %v1843 = vld [vmem:[#allocation6 + $0x458] sm:$0xff]
        %v1844 = vld [vmem:[#allocation6 + $0x460] sm:$0xff]
        %v1845 = vld [vmem:[#allocation6 + $0x468] sm:$0xff]
        %v1846 = vld [vmem:[#allocation6 + $0x470] sm:$0xff]
        %v1847 = vld [vmem:[#allocation6 + $0x478] sm:$0xff]
        %1848 = vmatprep.subr.mxu0 0.0
        %1849 = vmatpush1.msra.mxu0 %v1832
        %1850 = vmatprep.subr.mxu0 0.0
        %1851 = vmatpush1.msra.mxu0 %v1833
        %1852 = vmatprep.subr.mxu0 0.0
        %1853 = vmatpush1.msra.mxu0 %v1834
        %1854 = vmatprep.subr.mxu0 0.0
        %1855 = vmatpush1.msra.mxu0 %v1835
        %1856 = vmatprep.subr.mxu0 0.0
        %1857 = vmatpush1.msra.mxu0 %v1836
        %1858 = vmatprep.subr.mxu0 0.0
        %1859 = vmatpush1.msra.mxu0 %v1837
        %1860 = vmatprep.subr.mxu0 0.0
        %1861 = vmatpush1.msra.mxu0 %v1838
        %1862 = vmatprep.subr.mxu0 0.0
        %1863 = vmatpush1.msra.mxu0 %v1839
        %1864 = vmatprep.subr.mxu0 0.0
        %1865 = vmatpush1.msra.mxu0 %v1840
        %1866 = vmatprep.subr.mxu0 0.0
        %1867 = vmatpush1.msra.mxu0 %v1841
        %1868 = vmatprep.subr.mxu0 0.0
        %1869 = vmatpush1.msra.mxu0 %v1842
        %1870 = vmatprep.subr.mxu0 0.0
        %1871 = vmatpush1.msra.mxu0 %v1843
        %1872 = vmatprep.subr.mxu0 0.0
        %1873 = vmatpush1.msra.mxu0 %v1844
        %1874 = vmatprep.subr.mxu0 0.0
        %1875 = vmatpush1.msra.mxu0 %v1845
        %1876 = vmatprep.subr.mxu0 0.0
        %1877 = vmatpush1.msra.mxu0 %v1846
        %1878 = vmatprep.subr.mxu0 0.0
        %1879 = vmatpush1.msra.mxu0 %v1847
        %1880 = vmatprep.subr.mxu0 0.0
        %1881 = vmatpush1.msra.mxu0 0.0
        %1882 = vmatprep.subr.mxu0 0.0
        %1883 = vmatpush1.msra.mxu0 0.0
        %1884 = vmatprep.subr.mxu0 0.0
        %1885 = vmatpush1.msra.mxu0 0.0
        %1886 = vmatprep.subr.mxu0 0.0
        %1887 = vmatpush1.msra.mxu0 0.0
        %1888 = vmatprep.subr.mxu0 0.0
        %1889 = vmatpush1.msra.mxu0 0.0
        %1890 = vmatprep.subr.mxu0 0.0
        %1891 = vmatpush1.msra.mxu0 0.0
        %1892 = vmatprep.subr.mxu0 0.0
        %1893 = vmatpush1.msra.mxu0 0.0
        %1894 = vmatprep.subr.mxu0 0.0
        %1895 = vmatpush1.msra.mxu0 0.0
        %1896 = vmatprep.subr.mxu0 0.0
        %1897 = vmatpush1.msra.mxu0 0.0
        %1898 = vmatprep.subr.mxu0 0.0
        %1899 = vmatpush1.msra.mxu0 0.0
        %1900 = vmatprep.subr.mxu0 0.0
        %1901 = vmatpush1.msra.mxu0 0.0
        %1902 = vmatprep.subr.mxu0 0.0
        %1903 = vmatpush1.msra.mxu0 0.0
        %1904 = vmatprep.subr.mxu0 0.0
        %1905 = vmatpush1.msra.mxu0 0.0
        %1906 = vmatprep.subr.mxu0 0.0
        %1907 = vmatpush1.msra.mxu0 0.0
        %1908 = vmatprep.subr.mxu0 0.0
        %1909 = vmatpush1.msra.mxu0 0.0
        %1910 = vmatprep.subr.mxu0 0.0
        %1911 = vmatpush1.msra.mxu0 0.0
        %1912 = vmatprep.mubr.f32.mxu0 0.0
        %1913 = vmatmul.mubr.f32.gmra.mrb[0].mxu0 %v1824
        %v1914 = vpop.f32.mrb[0].mxu0
        %v1915 = vadd.f32 0.0, %v1914
        %v1916 = vpop.f32.mrb[0].mxu0
        %1917 = vmatprep.mubr.f32.mxu0 0.0
        %1918 = vmatmul.mubr.f32.gmra.mrb[0].mxu0 %v1825
        %v1919 = vpop.f32.mrb[0].mxu0
        %v1920 = vadd.f32 0.0, %v1919
        %v1921 = vpop.f32.mrb[0].mxu0
        %1922 = vmatprep.mubr.f32.mxu0 0.0
        %1923 = vmatmul.mubr.f32.gmra.mrb[0].mxu0 %v1826
        %v1924 = vpop.f32.mrb[0].mxu0
        %v1925 = vadd.f32 0.0, %v1924
        %v1926 = vpop.f32.mrb[0].mxu0
        %1927 = vmatprep.mubr.f32.mxu0 0.0
        %1928 = vmatmul.mubr.f32.gmra.mrb[0].mxu0 %v1827
        %v1929 = vpop.f32.mrb[0].mxu0
        %v1930 = vadd.f32 0.0, %v1929
        %v1931 = vpop.f32.mrb[0].mxu0
        %1932 = vmatprep.mubr.f32.mxu0 0.0
        %1933 = vmatmul.mubr.f32.gmra.mrb[0].mxu0 %v1828
        %v1934 = vpop.f32.mrb[0].mxu0
        %v1935 = vadd.f32 0.0, %v1934
        %v1936 = vpop.f32.mrb[0].mxu0
        %1937 = vmatprep.mubr.f32.mxu0 0.0
        %1938 = vmatmul.mubr.f32.gmra.mrb[0].mxu0 %v1829
        %v1939 = vpop.f32.mrb[0].mxu0
        %v1940 = vadd.f32 0.0, %v1939
        %v1941 = vpop.f32.mrb[0].mxu0
        %1942 = vmatprep.mubr.f32.mxu0 0.0
        %1943 = vmatmul.mubr.f32.gmra.mrb[0].mxu0 %v1830
        %v1944 = vpop.f32.mrb[0].mxu0
        %v1945 = vadd.f32 0.0, %v1944
        %v1946 = vpop.f32.mrb[0].mxu0
        %1947 = vmatprep.mubr.f32.mxu0 0.0
        %1948 = vmatmul.mubr.f32.gmra.mrb[0].mxu0 %v1831
        %v1949 = vpop.f32.mrb[0].mxu0
        %v1950 = vadd.f32 0.0, %v1949
        %v1951 = vpop.f32.mrb[0].mxu0
        %1952 = vdwg.mxu0
        %v1953 = vadd.f32 %v1808, %v1915
        %v1954 = vadd.f32 %v1809, %v1920
        %v1955 = vadd.f32 %v1810, %v1925
        %v1956 = vadd.f32 %v1811, %v1930
        %v1957 = vadd.f32 %v1812, %v1935
        %v1958 = vadd.f32 %v1813, %v1940
        %v1959 = vadd.f32 %v1814, %v1945
        %v1960 = vadd.f32 %v1815, %v1950
        %v1961 = vld [vmem:[%s4] sm:$0x1]
        %v1963 = vlaneseq
        %v1964 = vshrl.u32 %v1963, 7
        %v1965 = vsub.s32 0, %v1964
        %v1966 = vrot.slane %v1961, %v1965
        %v1968 = vadd.f32 %v1953, %v1966
        %v1969 = vadd.f32 %v1954, %v1966
        %v1970 = vadd.f32 %v1955, %v1966
        %v1971 = vadd.f32 %v1956, %v1966
        %v1972 = vadd.f32 %v1957, %v1966
        %v1973 = vadd.f32 %v1958, %v1966
        %v1974 = vadd.f32 %v1959, %v1966
        %v1975 = vadd.f32 %v1960, %v1966
        %v1976 = vmax.f32 %v1968, 0.0
        %v1977 = vmax.f32 %v1969, 0.0
        %v1978 = vmax.f32 %v1970, 0.0
        %v1979 = vmax.f32 %v1971, 0.0
        %v1980 = vmax.f32 %v1972, 0.0
        %v1981 = vmax.f32 %v1973, 0.0
        %v1982 = vmax.f32 %v1974, 0.0
        %v1983 = vmax.f32 %v1975, 0.0
        %v1984 = vld [vmem:[#allocation8] sm:$0xff]
        %v1985 = vld [vmem:[#allocation8 + $0x8] sm:$0xff]
        %v1986 = vld [vmem:[#allocation8 + $0x10] sm:$0xff]
        %v1987 = vld [vmem:[#allocation8 + $0x18] sm:$0xff]
        %v1988 = vld [vmem:[#allocation8 + $0x20] sm:$0xff]
        %v1989 = vld [vmem:[#allocation8 + $0x28] sm:$0xff]
        %v1990 = vld [vmem:[#allocation8 + $0x30] sm:$0xff]
        %v1991 = vld [vmem:[#allocation8 + $0x38] sm:$0xff]
        %v1992 = vld [vmem:[#allocation8 + $0x40] sm:$0xff]
        %v1993 = vld [vmem:[#allocation8 + $0x48] sm:$0xff]
        %v1994 = vld [vmem:[#allocation8 + $0x50] sm:$0xff]
        %v1995 = vld [vmem:[#allocation8 + $0x58] sm:$0xff]
        %v1996 = vld [vmem:[#allocation8 + $0x60] sm:$0xff]
        %v1997 = vld [vmem:[#allocation8 + $0x68] sm:$0xff]
        %v1998 = vld [vmem:[#allocation8 + $0x70] sm:$0xff]
        %v1999 = vld [vmem:[#allocation8 + $0x78] sm:$0xff]
        %v2000 = vld [vmem:[%s6] sm:$0x1]
        %v2002 = vlaneseq
        %v2003 = vshrl.u32 %v2002, 7
        %v2004 = vsub.s32 0, %v2003
        %v2005 = vrot.slane %v2000, %v2004
        %2007 = vmatprep.subr.mxu0 0.0
        %2008 = vmatpush1.msra.mxu0 %v1984
        %2009 = vmatprep.subr.mxu0 0.0
        %2010 = vmatpush1.msra.mxu0 %v1985
        %2011 = vmatprep.subr.mxu0 0.0
        %2012 = vmatpush1.msra.mxu0 %v1986
        %2013 = vmatprep.subr.mxu0 0.0
        %2014 = vmatpush1.msra.mxu0 %v1987
        %2015 = vmatprep.subr.mxu0 0.0
        %2016 = vmatpush1.msra.mxu0 %v1988
        %2017 = vmatprep.subr.mxu0 0.0
        %2018 = vmatpush1.msra.mxu0 %v1989
        %2019 = vmatprep.subr.mxu0 0.0
        %2020 = vmatpush1.msra.mxu0 %v1990
        %2021 = vmatprep.subr.mxu0 0.0
        %2022 = vmatpush1.msra.mxu0 %v1991
        %2023 = vmatprep.subr.mxu0 0.0
        %2024 = vmatpush1.msra.mxu0 %v1992
        %2025 = vmatprep.subr.mxu0 0.0
        %2026 = vmatpush1.msra.mxu0 %v1993
        %2027 = vmatprep.subr.mxu0 0.0
        %2028 = vmatpush1.msra.mxu0 %v1994
        %2029 = vmatprep.subr.mxu0 0.0
        %2030 = vmatpush1.msra.mxu0 %v1995
        %2031 = vmatprep.subr.mxu0 0.0
        %2032 = vmatpush1.msra.mxu0 %v1996
        %2033 = vmatprep.subr.mxu0 0.0
        %2034 = vmatpush1.msra.mxu0 %v1997
        %2035 = vmatprep.subr.mxu0 0.0
        %2036 = vmatpush1.msra.mxu0 %v1998
        %2037 = vmatprep.subr.mxu0 0.0
        %2038 = vmatpush1.msra.mxu0 %v1999
        %2039 = vmatprep.subr.mxu0 0.0
        %2040 = vmatpush1.msra.mxu0 0.0
        %2041 = vmatprep.subr.mxu0 0.0
        %2042 = vmatpush1.msra.mxu0 0.0
        %2043 = vmatprep.subr.mxu0 0.0
        %2044 = vmatpush1.msra.mxu0 0.0
        %2045 = vmatprep.subr.mxu0 0.0
        %2046 = vmatpush1.msra.mxu0 0.0
        %2047 = vmatprep.subr.mxu0 0.0
        %2048 = vmatpush1.msra.mxu0 0.0
        %2049 = vmatprep.subr.mxu0 0.0
        %2050 = vmatpush1.msra.mxu0 0.0
        %2051 = vmatprep.subr.mxu0 0.0
        %2052 = vmatpush1.msra.mxu0 0.0
        %2053 = vmatprep.subr.mxu0 0.0
        %2054 = vmatpush1.msra.mxu0 0.0
        %2055 = vmatprep.subr.mxu0 0.0
        %2056 = vmatpush1.msra.mxu0 0.0
        %2057 = vmatprep.subr.mxu0 0.0
        %2058 = vmatpush1.msra.mxu0 0.0
        %2059 = vmatprep.subr.mxu0 0.0
        %2060 = vmatpush1.msra.mxu0 0.0
        %2061 = vmatprep.subr.mxu0 0.0
        %2062 = vmatpush1.msra.mxu0 0.0
        %2063 = vmatprep.subr.mxu0 0.0
        %2064 = vmatpush1.msra.mxu0 0.0
        %2065 = vmatprep.subr.mxu0 0.0
        %2066 = vmatpush1.msra.mxu0 0.0
        %2067 = vmatprep.subr.mxu0 0.0
        %2068 = vmatpush1.msra.mxu0 0.0
        %2069 = vmatprep.subr.mxu0 0.0
        %2070 = vmatpush1.msra.mxu0 0.0
        %2071 = vmatprep.mubr.f32.mxu0 0.0
        %2072 = vmatmul.mubr.f32.gmra.mrb[0].mxu0 %v1976
        %v2073 = vpop.f32.mrb[0].mxu0
        %v2074 = vadd.f32 %v2005, %v2073
        %v2075 = vpop.f32.mrb[0].mxu0
        %2076 = vmatprep.mubr.f32.mxu0 0.0
        %2077 = vmatmul.mubr.f32.gmra.mrb[0].mxu0 %v1977
        %v2078 = vpop.f32.mrb[0].mxu0
        %v2079 = vadd.f32 %v2005, %v2078
        %v2080 = vpop.f32.mrb[0].mxu0
        %2081 = vmatprep.mubr.f32.mxu0 0.0
        %2082 = vmatmul.mubr.f32.gmra.mrb[0].mxu0 %v1978
        %v2083 = vpop.f32.mrb[0].mxu0
        %v2084 = vadd.f32 %v2005, %v2083
        %v2085 = vpop.f32.mrb[0].mxu0
        %2086 = vmatprep.mubr.f32.mxu0 0.0
        %2087 = vmatmul.mubr.f32.gmra.mrb[0].mxu0 %v1979
        %v2088 = vpop.f32.mrb[0].mxu0
        %v2089 = vadd.f32 %v2005, %v2088
        %v2090 = vpop.f32.mrb[0].mxu0
        %2091 = vmatprep.mubr.f32.mxu0 0.0
        %2092 = vmatmul.mubr.f32.gmra.mrb[0].mxu0 %v1980
        %v2093 = vpop.f32.mrb[0].mxu0
        %v2094 = vadd.f32 %v2005, %v2093
        %v2095 = vpop.f32.mrb[0].mxu0
        %2096 = vmatprep.mubr.f32.mxu0 0.0
        %2097 = vmatmul.mubr.f32.gmra.mrb[0].mxu0 %v1981
        %v2098 = vpop.f32.mrb[0].mxu0
        %v2099 = vadd.f32 %v2005, %v2098
        %v2100 = vpop.f32.mrb[0].mxu0
        %2101 = vmatprep.mubr.f32.mxu0 0.0
        %2102 = vmatmul.mubr.f32.gmra.mrb[0].mxu0 %v1982
        %v2103 = vpop.f32.mrb[0].mxu0
        %v2104 = vadd.f32 %v2005, %v2103
        %v2105 = vpop.f32.mrb[0].mxu0
        %2106 = vmatprep.mubr.f32.mxu0 0.0
        %2107 = vmatmul.mubr.f32.gmra.mrb[0].mxu0 %v1983
        %v2108 = vpop.f32.mrb[0].mxu0
        %v2109 = vadd.f32 %v2005, %v2108
        %v2110 = vpop.f32.mrb[0].mxu0
        %2111 = vdwg.mxu0
        %v2112 = vld [vmem:[#allocation9] sm:$0xff]
        %v2113 = vld [vmem:[#allocation9 + $0x8] sm:$0xff]
        %v2114 = vld [vmem:[#allocation9 + $0x10] sm:$0xff]
        %v2115 = vld [vmem:[#allocation9 + $0x18] sm:$0xff]
        %v2116 = vld [vmem:[#allocation9 + $0x20] sm:$0xff]
        %v2117 = vld [vmem:[#allocation9 + $0x28] sm:$0xff]
        %v2118 = vld [vmem:[#allocation9 + $0x30] sm:$0xff]
        %v2119 = vld [vmem:[#allocation9 + $0x38] sm:$0xff]
        %v2120 = vld [vmem:[#allocation9 + $0x40] sm:$0xff]
        %v2121 = vld [vmem:[#allocation9 + $0x48] sm:$0xff]
        %v2122 = vld [vmem:[#allocation9 + $0x50] sm:$0xff]
        %v2123 = vld [vmem:[#allocation9 + $0x58] sm:$0xff]
        %v2124 = vld [vmem:[#allocation9 + $0x60] sm:$0xff]
        %v2125 = vld [vmem:[#allocation9 + $0x68] sm:$0xff]
        %v2126 = vld [vmem:[#allocation9 + $0x70] sm:$0xff]
        %v2127 = vld [vmem:[#allocation9 + $0x78] sm:$0xff]
        %2128 = vmatprep.subr.mxu0 0.0
        %2129 = vmatpush1.msra.mxu0 %v2112
        %2130 = vmatprep.subr.mxu0 0.0
        %2131 = vmatpush1.msra.mxu0 %v2113
        %2132 = vmatprep.subr.mxu0 0.0
        %2133 = vmatpush1.msra.mxu0 %v2114
        %2134 = vmatprep.subr.mxu0 0.0
        %2135 = vmatpush1.msra.mxu0 %v2115
        %2136 = vmatprep.subr.mxu0 0.0
        %2137 = vmatpush1.msra.mxu0 %v2116
        %2138 = vmatprep.subr.mxu0 0.0
        %2139 = vmatpush1.msra.mxu0 %v2117
        %2140 = vmatprep.subr.mxu0 0.0
        %2141 = vmatpush1.msra.mxu0 %v2118
        %2142 = vmatprep.subr.mxu0 0.0
        %2143 = vmatpush1.msra.mxu0 %v2119
        %2144 = vmatprep.subr.mxu0 0.0
        %2145 = vmatpush1.msra.mxu0 %v2120
        %2146 = vmatprep.subr.mxu0 0.0
        %2147 = vmatpush1.msra.mxu0 %v2121
        %2148 = vmatprep.subr.mxu0 0.0
        %2149 = vmatpush1.msra.mxu0 %v2122
        %2150 = vmatprep.subr.mxu0 0.0
        %2151 = vmatpush1.msra.mxu0 %v2123
        %2152 = vmatprep.subr.mxu0 0.0
        %2153 = vmatpush1.msra.mxu0 %v2124
        %2154 = vmatprep.subr.mxu0 0.0
        %2155 = vmatpush1.msra.mxu0 %v2125
        %2156 = vmatprep.subr.mxu0 0.0
        %2157 = vmatpush1.msra.mxu0 %v2126
        %2158 = vmatprep.subr.mxu0 0.0
        %2159 = vmatpush1.msra.mxu0 %v2127
        %2160 = vmatprep.subr.mxu0 0.0
        %2161 = vmatpush1.msra.mxu0 0.0
        %2162 = vmatprep.subr.mxu0 0.0
        %2163 = vmatpush1.msra.mxu0 0.0
        %2164 = vmatprep.subr.mxu0 0.0
        %2165 = vmatpush1.msra.mxu0 0.0
        %2166 = vmatprep.subr.mxu0 0.0
        %2167 = vmatpush1.msra.mxu0 0.0
        %2168 = vmatprep.subr.mxu0 0.0
        %2169 = vmatpush1.msra.mxu0 0.0
        %2170 = vmatprep.subr.mxu0 0.0
        %2171 = vmatpush1.msra.mxu0 0.0
        %2172 = vmatprep.subr.mxu0 0.0
        %2173 = vmatpush1.msra.mxu0 0.0
        %2174 = vmatprep.subr.mxu0 0.0
        %2175 = vmatpush1.msra.mxu0 0.0
        %2176 = vmatprep.subr.mxu0 0.0
        %2177 = vmatpush1.msra.mxu0 0.0
        %2178 = vmatprep.subr.mxu0 0.0
        %2179 = vmatpush1.msra.mxu0 0.0
        %2180 = vmatprep.subr.mxu0 0.0
        %2181 = vmatpush1.msra.mxu0 0.0
        %2182 = vmatprep.subr.mxu0 0.0
        %2183 = vmatpush1.msra.mxu0 0.0
        %2184 = vmatprep.subr.mxu0 0.0
        %2185 = vmatpush1.msra.mxu0 0.0
        %2186 = vmatprep.subr.mxu0 0.0
        %2187 = vmatpush1.msra.mxu0 0.0
        %2188 = vmatprep.subr.mxu0 0.0
        %2189 = vmatpush1.msra.mxu0 0.0
        %2190 = vmatprep.subr.mxu0 0.0
        %2191 = vmatpush1.msra.mxu0 0.0
        %2192 = vmatprep.mubr.f32.mxu0 0.0
        %2193 = vmatmul.mubr.f32.gmra.mrb[0].mxu0 %v444
        %v2194 = vpop.f32.mrb[0].mxu0
        %v2195 = vadd.f32 0.0, %v2194
        %v2196 = vpop.f32.mrb[0].mxu0
        %2197 = vmatprep.mubr.f32.mxu0 0.0
        %2198 = vmatmul.mubr.f32.gmra.mrb[0].mxu0 %v445
        %v2199 = vpop.f32.mrb[0].mxu0
        %v2200 = vadd.f32 0.0, %v2199
        %v2201 = vpop.f32.mrb[0].mxu0
        %2202 = vmatprep.mubr.f32.mxu0 0.0
        %2203 = vmatmul.mubr.f32.gmra.mrb[0].mxu0 %v446
        %v2204 = vpop.f32.mrb[0].mxu0
        %v2205 = vadd.f32 0.0, %v2204
        %v2206 = vpop.f32.mrb[0].mxu0
        %2207 = vmatprep.mubr.f32.mxu0 0.0
        %2208 = vmatmul.mubr.f32.gmra.mrb[0].mxu0 %v447
        %v2209 = vpop.f32.mrb[0].mxu0
        %v2210 = vadd.f32 0.0, %v2209
        %v2211 = vpop.f32.mrb[0].mxu0
        %2212 = vmatprep.mubr.f32.mxu0 0.0
        %2213 = vmatmul.mubr.f32.gmra.mrb[0].mxu0 %v448
        %v2214 = vpop.f32.mrb[0].mxu0
        %v2215 = vadd.f32 0.0, %v2214
        %v2216 = vpop.f32.mrb[0].mxu0
        %2217 = vmatprep.mubr.f32.mxu0 0.0
        %2218 = vmatmul.mubr.f32.gmra.mrb[0].mxu0 %v449
        %v2219 = vpop.f32.mrb[0].mxu0
        %v2220 = vadd.f32 0.0, %v2219
        %v2221 = vpop.f32.mrb[0].mxu0
        %2222 = vmatprep.mubr.f32.mxu0 0.0
        %2223 = vmatmul.mubr.f32.gmra.mrb[0].mxu0 %v450
        %v2224 = vpop.f32.mrb[0].mxu0
        %v2225 = vadd.f32 0.0, %v2224
        %v2226 = vpop.f32.mrb[0].mxu0
        %2227 = vmatprep.mubr.f32.mxu0 0.0
        %2228 = vmatmul.mubr.f32.gmra.mrb[0].mxu0 %v451
        %v2229 = vpop.f32.mrb[0].mxu0
        %v2230 = vadd.f32 0.0, %v2229
        %v2231 = vpop.f32.mrb[0].mxu0
        %2232 = vdwg.mxu0
        %v2233 = vadd.f32 %v2074, %v2195
        %v2234 = vadd.f32 %v2079, %v2200
        %v2235 = vadd.f32 %v2084, %v2205
        %v2236 = vadd.f32 %v2089, %v2210
        %v2237 = vadd.f32 %v2094, %v2215
        %v2238 = vadd.f32 %v2099, %v2220
        %v2239 = vadd.f32 %v2104, %v2225
        %v2240 = vadd.f32 %v2109, %v2230
        %v2241 = vld [vmem:[%s8] sm:$0x1]
        %v2243 = vlaneseq
        %v2244 = vshrl.u32 %v2243, 7
        %v2245 = vsub.s32 0, %v2244
        %v2246 = vrot.slane %v2241, %v2245
        %v2248 = vadd.f32 %v2233, %v2246
        %v2249 = vadd.f32 %v2234, %v2246
        %v2250 = vadd.f32 %v2235, %v2246
        %v2251 = vadd.f32 %v2236, %v2246
        %v2252 = vadd.f32 %v2237, %v2246
        %v2253 = vadd.f32 %v2238, %v2246
        %v2254 = vadd.f32 %v2239, %v2246
        %v2255 = vadd.f32 %v2240, %v2246
        %v2256 = vmax.f32 %v2248, 0.0
        %v2257 = vmax.f32 %v2249, 0.0
        %v2258 = vmax.f32 %v2250, 0.0
        %v2259 = vmax.f32 %v2251, 0.0
        %v2260 = vmax.f32 %v2252, 0.0
        %v2261 = vmax.f32 %v2253, 0.0
        %v2262 = vmax.f32 %v2254, 0.0
        %v2263 = vmax.f32 %v2255, 0.0
        %2264 = vst [vmem:[%s438] sm:$0xff] %v2256
        %2265 = vst [vmem:[%s438 + $0x8] sm:$0xff] %v2257
        %2266 = vst [vmem:[%s438 + $0x10] sm:$0xff] %v2258
        %2267 = vst [vmem:[%s438 + $0x18] sm:$0xff] %v2259
        %2268 = vst [vmem:[%s438 + $0x20] sm:$0xff] %v2260
        %2269 = vst [vmem:[%s438 + $0x28] sm:$0xff] %v2261
        %2270 = vst [vmem:[%s438 + $0x30] sm:$0xff] %v2262
        %2271 = vst [vmem:[%s438 + $0x38] sm:$0xff] %v2263
        %s2272 = sand.u32 %s272, 1
        %s2273 = scalar_lea.sflag [#allocation5], %s2272
        %s2274 = sand.u32 %s272, 1
        %s2275 = smul.addr %s2274, 64
        %s2276 = scalar_lea.vmem [#allocation11], %s2275
        // Predicated region
        $region81: #{tpu_custom_call.1} parent=63 // pred_check
          %p2277 = pneg %p282
        $region82: #{tpu_custom_call.1} parent=63 // pred_check_branch
          %2279 = sbr.rel (%p2277) target = $region84
        $region83: #{tpu_custom_call.1} parent=63 // pred_region
          %s2281 = ssub.s32 1024, 1024
          %2282 = vsyncadd %s2273, %s2281
          %s2283 = smul.addr %s28, 8
          %s2284 = smul.addr %s2283, 128
          %s2285 = scalar_lea.hbm %s11, %s2284
          %s2286 = sshll.u32 %s2276, 4
          %s2287 = int_to_ptr.vmem [resolvable:$true] %s2286
          %2292 = dma.vmem_to_hbm [thread:$0]  %s2287, 1024, %s2285, %s2273, 128, 128, 8
        $region84: #{tpu_custom_call.1} parent=63 // pred_fallthru
          _
      $region64: #{tpu_custom_call.1} parent=5 // pred_fallthru
        _
      %p2293 = scmp.le.s32.totalorder 2, %s23
      // Predicated region
      $region85: #{tpu_custom_call.1} parent=5 // pred_check
        %p2294 = pneg %p2293
      $region86: #{tpu_custom_call.1} parent=5 // pred_check_branch
        %2296 = sbr.rel (%p2294) target = $region88
      $region87: #{tpu_custom_call.1} parent=5 // pred_region
        %s2297 = ssub.s32 %s23, 2
        // Predicated region
        $region89: #{tpu_custom_call.1} parent=87 // pred_check
          %p2298 = pneg %p288
        $region90: #{tpu_custom_call.1} parent=87 // pred_check_branch
          %2300 = sbr.rel (%p2298) target = $region92
        $region91: #{tpu_custom_call.1} parent=87 // pred_region
          %s2301 = sand.u32 %s273, 1
          %s2302 = scalar_lea.sflag [#allocation5], %s2301
          %s2303 = sand.u32 %s273, 1
          %s2304 = smul.addr %s2303, 64
          %s2305 = scalar_lea.vmem [#allocation11], %s2304
          %2306 = dma.done %s2302, 1024
        $region92: #{tpu_custom_call.1} parent=87 // pred_fallthru
          _
      $region88: #{tpu_custom_call.1} parent=5 // pred_fallthru
        _
    $region6: #{tpu_custom_call.1} parent=1 // loop_footer
      %s27 = sadd.s32 1, %s23
    $region7: #{tpu_custom_call.1} parent=1 // loop_footer_branch
      %22 = sbr.rel target = $region3
    $region8: #{tpu_custom_call.1} parent=1 // loop_exit
      _
    %2307 = vsyncpa [#allocation4], 1
    %s2308 = scalar_lea.sflag [#allocation4], 1
    %2309 = vsyncpa %s2308, 1
    %2310 = vsyncpa [#allocation7], 1
    %2311 = vsyncpa [#allocation10], 1
    %2312 = vsyncpa [#allocation5], 1
    %s2313 = scalar_lea.sflag [#allocation5], 1
    %2314 = vsyncpa %s2313, 1

</llo_original>
